<compile_context>
chip_gen: v7x
topology: tpu7x:2x2x1
jax: 0.10.0
libtpu: 0.0.40
codegen_flags: <defaults>
</compile_context>

<pallas_src>
import math

import jax
import jax.numpy as jnp
import numpy as np
from jax.experimental import pallas as pl
from jax.experimental.pallas import tpu as pltpu

# ------------------------- model hyper-parameters (small, synthetic) --------
CHUNK_FRAMES = 32          # T_chunk
N_MELS = 16                # M_bands
FEAT_DIM_BASE = 8          # feat_dim_base  ->  feat_dim = 32
FEAT_DIM = FEAT_DIM_BASE * 4
TARGET_DIM = 4
BN_EPS = 1e-5

C1 = FEAT_DIM_BASE                      # conv1 out channels
C2 = FEAT_DIM_BASE * 2                  # conv2 out channels
C3 = FEAT_DIM                           # conv3 out channels
H1 = (CHUNK_FRAMES - 4) // 2 + 1        # 15 temporal steps after conv1
H2 = (H1 - 4) // 2 + 1                  # 6
H3 = (H2 - 4) // 2 + 1                  # 2
LANES = 128                             # lane-dense width for activations/outputs

assert H1 * C1 <= LANES and H2 * C2 <= LANES and C3 <= LANES


def _round_up(x, m):
    return ((x + m - 1) // m) * m


def _default_n_tile(n):
    # Chunks per conv grid step.  Multiple of 16 (bf16-native sublane tile),
    # capped at 1024 so the per-step working set stays a few MiB (well inside
    # scoped-VMEM defaults on v5e/v6e/v7x even double-buffered), and ~n//2 so the
    # "parallel" grid has >= 2 steps whenever possible (keeps both v7x TCs busy).
    if n <= 16:
        return 16
    return min(1024, _round_up(max(16, n // 2), 16))


def positional_encoding(L, D):
    pos = jnp.arange(L, dtype=jnp.float32)[:, None]
    div = jnp.exp(jnp.arange(0, D, 2, dtype=jnp.float32) * (-math.log(10000.0) / D))
    pe = jnp.zeros((L, D), jnp.float32)
    pe = pe.at[:, 0::2].set(jnp.sin(pos * div))
    pe = pe.at[:, 1::2].set(jnp.cos(pos * div))
    return pe


# ---------------------------------------------------------------------------
# Kernel 1: conv tower (3x [Conv2d + folded BN + ReLU]) + temporal max-pool,
# for a tile of N_TILE chunks per grid step.  Exactly one MXU matmul per layer.
# ---------------------------------------------------------------------------
def _conv_tower_kernel(x_ref, w1_ref, w2_ref, w3_ref, b_ref, out_ref):
    # x_ref  : (N_TILE, T*M)   bf16, each chunk flattened time-major (t*M + m).
    # w?_ref : banded (block-Toeplitz) conv weights, BN scale folded, bf16:
    #          w1 (T*M, 128), w2 (128, 128), w3 (128, H3*128).
    # b_ref  : (3, H3*128) f32 packed per-layer banded biases (lane-padded).
    # out_ref: (N_TILE, 128)   bf16 lane-dense chunk features (valid: [:, :FEAT_DIM]).
    b = b_ref[...]

    # layer 1: one (N_TILE, 512) @ (512, 128) matmul; output lanes are the
    # (time-step, channel) pairs h*C1 + c, zero-padded up to 128 lanes.
    h1 = jnp.maximum(
        jnp.dot(x_ref[...], w1_ref[...], preferred_element_type=jnp.float32)
        + b[0:1, :LANES], 0.0)

    # layers 2 / 3: lane-dense activations feed banded weights directly (zero
    # weight rows for the padded lanes) -> no window building / slicing at all.
    h2 = jnp.maximum(
        jnp.dot(h1.astype(jnp.bfloat16), w2_ref[...],
                preferred_element_type=jnp.float32) + b[1:2, :LANES], 0.0)
    h3 = jnp.maximum(
        jnp.dot(h2.astype(jnp.bfloat16), w3_ref[...],
                preferred_element_type=jnp.float32) + b[2:3, :], 0.0)

    # temporal max-pool over the H3 remaining steps: layer-3 columns are laid out
    # at h*128 + c, so every operand is a 128-aligned lane slice; padded lanes
    # are exactly 0 so the stored slab is zero beyond FEAT_DIM.
    feat = h3[:, :LANES]
    for hh in range(1, H3):
        feat = jnp.maximum(feat, h3[:, hh * LANES:(hh + 1) * LANES])
    out_ref[...] = feat.astype(out_ref.dtype)


def conv_features(x2d_bf16, packed, n_tile):
    # x2d_bf16: (N_pad, T*M) bf16 -> (N_pad, 128) bf16 lane-dense feature slab.
    n_pad, tm = x2d_bf16.shape
    assert n_tile % 16 == 0, "n_tile must be a multiple of 16 (bf16 sublane tile)"
    assert n_pad % n_tile == 0
    grid = (n_pad // n_tile,)
    return pl.pallas_call(
        _conv_tower_kernel,
        out_shape=jax.ShapeDtypeStruct((n_pad, LANES), jnp.bfloat16),
        grid=grid,
        in_specs=[
            pl.BlockSpec((n_tile, tm), lambda i: (i, 0)),
            pl.BlockSpec(packed["w1b"].shape, lambda i: (0, 0)),
            pl.BlockSpec(packed["w2b"].shape, lambda i: (0, 0)),
            pl.BlockSpec(packed["w3b"].shape, lambda i: (0, 0)),
            pl.BlockSpec(packed["b_pack"].shape, lambda i: (0, 0)),
        ],
        out_specs=pl.BlockSpec((n_tile, LANES), lambda i: (i, 0)),
        compiler_params=pltpu.CompilerParams(
            dimension_semantics=("parallel",),
            vmem_limit_bytes=32 * 1024 * 1024),
    )(x2d_bf16, packed["w1b"], packed["w2b"], packed["w3b"], packed["b_pack"])


# ---------------------------------------------------------------------------
# Kernel 2: positional encoding + attention MLP + masked softmax + attention
# pooling + regression head (whole batch, single lean invocation).
# ---------------------------------------------------------------------------
def _attn_regr_kernel(feats_ref, pe_ref, valid_ref, wa_ref, ab_ref,
                      wr1_ref, wr2_ref, rb_ref, out_ref, alpha_ref):
    b_sz, l, _ = alpha_ref.shape
    n = b_sz * l

    h = feats_ref[...][:n, :].astype(jnp.float32)     # (N, 128) pre-PE features
    xpe = h + pe_ref[...][:n, :]                      # PE zero-padded to 128 lanes

    wa = wa_ref[...]                                  # (128, 256): [:,:128]=wa1, [:,128:]=wa2
    ab = ab_ref[...]                                  # (3, 128)  : ba1, ba2, wa3-row
    a1 = jnp.maximum(
        jnp.dot(xpe, wa[:, :LANES], preferred_element_type=jnp.float32)
        + ab[0:1, :], 0.0)
    a2 = jnp.tanh(
        jnp.dot(a1, wa[:, LANES:], preferred_element_type=jnp.float32)
        + ab[1:2, :])
    # last attention-MLP layer: VPU multiply + lane reduction (no width-1 matmul).
    # ba3 shifts every logit equally; softmax is shift-invariant, so it cancels.
    logit = jnp.sum(a2 * ab[2:3, :], axis=1, keepdims=True)          # (N, 1)

    # vectorised masked softmax over the chunk axis (no per-batch Python unroll).
    # NOTE: zero-length sequences give NaN alpha (0/0) exactly like the reference;
    # callers must not pass zero lengths.
    valid = valid_ref[...]                                           # (B, L, 1) in {0,1}
    lg = logit.reshape(b_sz, l, 1) + (1.0 - valid) * (-1e30)
    mx = jnp.max(lg, axis=1, keepdims=True)                          # (B, 1, 1)
    e = jnp.exp(lg - mx) * valid
    alpha = e / jnp.sum(e, axis=1, keepdims=True)                    # (B, L, 1)
    alpha_ref[...] = alpha

    # attention pooling over the pre-PE features, then regression head.
    pooled = jnp.sum(alpha * h.reshape(b_sz, l, LANES), axis=1)      # (B, 128)
    rb = rb_ref[...]                                                 # (2, 128)
    r1 = jnp.maximum(
        jnp.dot(pooled, wr1_ref[...], preferred_element_type=jnp.float32)
        + rb[0:1, :], 0.0)
    z = jnp.dot(r1, wr2_ref[...], preferred_element_type=jnp.float32) + rb[1:2, :]
    out_ref[...] = jax.nn.sigmoid(z)                                 # (B, 128) lane-dense


def attn_regr(feats, pe_pad, valid, packed, b, l, n_att):
    in_specs = [
        pl.BlockSpec((n_att, LANES), lambda i: (0, 0)),   # first ~N rows of the slab
        pl.BlockSpec(pe_pad.shape, lambda i: (0, 0)),
        pl.BlockSpec(valid.shape, lambda i: (0, 0, 0)),
        pl.BlockSpec(packed["wa_pack"].shape, lambda i: (0, 0)),
        pl.BlockSpec(packed["ab_pack"].shape, lambda i: (0, 0)),
        pl.BlockSpec(packed["wr1_pad"].shape, lambda i: (0, 0)),
        pl.BlockSpec(packed["wr2_pad"].shape, lambda i: (0, 0)),
        pl.BlockSpec(packed["rb_pack"].shape, lambda i: (0, 0)),
    ]
    out_shapes = (jax.ShapeDtypeStruct((b, LANES), jnp.float32),
                  jax.ShapeDtypeStruct((b, l, 1), jnp.float32))
    out_specs = (pl.BlockSpec((b, LANES), lambda i: (0, 0)),
                 pl.BlockSpec((b, l, 1), lambda i: (0, 0, 0)))
    # TODO(synk): for large B this call should get a per-song grid (grid=(B,),
    # "parallel") so v7x's second TensorCore shares the work; at B=2 it is noise.
    return pl.pallas_call(
        _attn_regr_kernel,
        out_shape=out_shapes,
        grid=(1,),
        in_specs=in_specs,
        out_specs=out_specs,
        compiler_params=pltpu.CompilerParams(dimension_semantics=("arbitrary",)),
    )(feats, pe_pad, valid, packed["wa_pack"], packed["ab_pack"],
      packed["wr1_pad"], packed["wr2_pad"], packed["rb_pack"])


# ---------------------------------------------------------------------------
# Parameters (deterministic synthetic init), packing, and full forward.
# ---------------------------------------------------------------------------
def init_params(key):
    ks = jax.random.split(key, 16)

    def nrm(k, shape, scale=0.05):
        return (scale * jax.random.normal(k, shape)).astype(jnp.float32)

    def bn_fold(k, c):
        kk = jax.random.split(k, 5)
        gamma = 1.0 + 0.1 * jax.random.normal(kk[0], (c,))
        beta = 0.1 * jax.random.normal(kk[1], (c,))
        mean = 0.1 * jax.random.normal(kk[2], (c,))
        var = 1.0 + 0.1 * jnp.abs(jax.random.normal(kk[3], (c,)))
        conv_bias = 0.05 * jax.random.normal(kk[4], (c,))
        scale = gamma / jnp.sqrt(var + BN_EPS)
        bias = (conv_bias - mean) * scale + beta
        return (scale.reshape(1, c).astype(jnp.float32),
                bias.reshape(1, c).astype(jnp.float32))

    p = {}
    # conv weights, layout (k_t, C_in, C_out)
    p["w1"] = nrm(ks[0], (4, N_MELS, C1))
    p["w2"] = nrm(ks[1], (4, C1, C2))
    p["w3"] = nrm(ks[2], (4, C2, C3))
    p["s1"], p["b1"] = bn_fold(ks[3], C1)
    p["s2"], p["b2"] = bn_fold(ks[4], C2)
    p["s3"], p["b3"] = bn_fold(ks[5], C3)
    # attention MLP
    p["wa1"] = nrm(ks[6], (FEAT_DIM, FEAT_DIM))
    p["ba1"] = nrm(ks[7], (1, FEAT_DIM))
    p["wa2"] = nrm(ks[8], (FEAT_DIM, FEAT_DIM))
    p["ba2"] = nrm(ks[9], (1, FEAT_DIM))
    p["wa3"] = nrm(ks[10], (FEAT_DIM, 1))
    p["ba3"] = nrm(ks[11], (1, 1))
    # regression head
    p["wr1"] = nrm(ks[12], (FEAT_DIM, 128))
    p["br1"] = nrm(ks[13], (1, 128))
    p["wr2"] = nrm(ks[14], (128, TARGET_DIM))
    p["br2"] = nrm(ks[15], (1, TARGET_DIM))
    return p


def _pad2(a, rows, cols):
    r, c = a.shape
    return jnp.zeros((rows, cols), jnp.float32).at[:r, :c].set(a.astype(jnp.float32))


def pack_params(p):
    """Fold BN(eval) into banded/block-Toeplitz conv weights; lane-pad everything."""

    def banded_weight(w, s, h_out, rows, cols, col_stride):
        # w: (4, c_in, c_out) conv weight (4 temporal taps, stride 2); s: (1, c_out)
        # folded BN scale.  Returns W so that for inputs whose lanes are flattened
        # (time, channel) pairs, (x @ W)[:, h*col_stride + c] is the conv output at
        # temporal step h, channel c.  All padding rows/cols are zero.
        k, cin, cout = w.shape
        blk = (w * s.reshape(1, 1, cout)).reshape(k * cin, cout).astype(jnp.float32)
        band = jnp.zeros((rows, cols), jnp.float32)
        for h in range(h_out):                       # taps are contiguous in time
            band = band.at[2 * h * cin:(2 * h + k) * cin,
                           h * col_stride:h * col_stride + cout].set(blk)
        return band

    def banded_bias(bias, h_out, cols, col_stride):
        c = bias.shape[1]
        bb = jnp.zeros((1, cols), jnp.float32)
        for h in range(h_out):
            bb = bb.at[:, h * col_stride:h * col_stride + c].set(bias)
        return bb

    w1b = banded_weight(p["w1"], p["s1"], H1, CHUNK_FRAMES * N_MELS, LANES, C1)
    w2b = banded_weight(p["w2"], p["s2"], H2, LANES, LANES, C2)
    # layer-3 columns placed at h*128 + c so the max-pool is 128-aligned slices.
    w3b = banded_weight(p["w3"], p["s3"], H3, LANES, H3 * LANES, LANES)
    b_pack = jnp.zeros((3, H3 * LANES), jnp.float32)
    b_pack = b_pack.at[0, :LANES].set(banded_bias(p["b1"], H1, LANES, C1)[0])
    b_pack = b_pack.at[1, :LANES].set(banded_bias(p["b2"], H2, LANES, C2)[0])
    b_pack = b_pack.at[2, :].set(banded_bias(p["b3"], H3, H3 * LANES, LANES)[0])

    return {
        # conv tower (bf16 weights: MXU-native, halves weight DMA)
        "w1b": w1b.astype(jnp.bfloat16),
        "w2b": w2b.astype(jnp.bfloat16),
        "w3b": w3b.astype(jnp.bfloat16),
        "b_pack": b_pack,                                         # f32
        # attention MLP (lane-padded to 128)
        "wa_pack": jnp.concatenate([_pad2(p["wa1"], LANES, LANES),
                                    _pad2(p["wa2"], LANES, LANES)], axis=1),
        "ab_pack": jnp.concatenate([_pad2(p["ba1"], 1, LANES),
                                    _pad2(p["ba2"], 1, LANES),
                                    _pad2(p["wa3"].T, 1, LANES)], axis=0),
        # regression head (lane-padded to 128)
        "wr1_pad": _pad2(p["wr1"], LANES, LANES),
        "wr2_pad": _pad2(p["wr2"], LANES, LANES),
        "rb_pack": jnp.concatenate([_pad2(p["br1"], 1, LANES),
                                    _pad2(p["br2"], 1, LANES)], axis=0),
    }


def music_highlighter_forward(params, x_blmt, chunk_lengths, n_tile=None):
    # x_blmt: (B, L_max, M_bands, T_chunk) — same convention as the PyTorch module.
    b, l, m, t = x_blmt.shape
    n = b * l
    # (B,L,M,T) -> (B,L,T,M) -> flatten each chunk time-major so the banded conv
    # matmul sees lanes indexed by t*M + m.
    x = jnp.transpose(x_blmt, (0, 1, 3, 2)).astype(jnp.float32)
    x2d = x.reshape(n, t * m)

    if n_tile is None:
        n_tile = _default_n_tile(n)
    assert n_tile % 16 == 0, "n_tile must be a multiple of 16 (bf16 sublane tile)"
    n_pad = _round_up(n, n_tile)
    if n_pad != n:
        # NOTE: padded rows produce relu(bias) garbage in the feature slab; the
        # attention kernel only ever reads the first N rows, so it is never used.
        x2d = jnp.concatenate([x2d, jnp.zeros((n_pad - n, t * m), jnp.float32)], 0)
    x2d = x2d.astype(jnp.bfloat16)           # HBM-bound input: ship as bf16

    packed = pack_params(params)
    feats = conv_features(x2d, packed, n_tile)                   # (n_pad, 128) bf16

    n_att = _round_up(n, 8)
    pe = positional_encoding(l, FEAT_DIM)                        # (L, F)
    pe_pad = jnp.zeros((n_att, LANES), jnp.float32)
    pe_pad = pe_pad.at[:n, :FEAT_DIM].set(jnp.tile(pe, (b, 1)))
    valid = (jnp.arange(l)[None, :] < chunk_lengths[:, None]).astype(jnp.float32)
    valid = valid.reshape(b, l, 1)

    out_pad, alpha = attn_regr(feats, pe_pad, valid, packed, b, l, n_att)
    return out_pad[:, :TARGET_DIM], alpha.reshape(b, l)


# ------------------------- pure-JAX reference (for checking) ----------------
def reference_forward(params, x_blmt, chunk_lengths):
    b, l, m, t = x_blmt.shape
    x = jnp.transpose(x_blmt, (0, 1, 3, 2)).reshape(b * l, t, m).astype(jnp.float32)

    def conv_bn_relu(inp, w, s, bb):
        t_in = inp.shape[1]
        h_out = (t_in - 4) // 2 + 1
        acc = 0.0
        for kt in range(4):
            xk = inp[:, kt: kt + 2 * (h_out - 1) + 1: 2, :]
            acc = acc + jnp.einsum("nhc,cd->nhd", xk, w[kt])
        return jnp.maximum(acc * s + bb, 0.0)

    h = conv_bn_relu(x, params["w1"], params["s1"], params["b1"])
    h = conv_bn_relu(h, params["w2"], params["s2"], params["b2"])
    h = conv_bn_relu(h, params["w3"], params["s3"], params["b3"])
    feats = jnp.max(h, axis=1)
    h_seq = feats.reshape(b, l, FEAT_DIM)
    pe = positional_encoding(l, FEAT_DIM)
    xa = (h_seq + pe[None]).reshape(b * l, FEAT_DIM)
    a1 = jnp.maximum(xa @ params["wa1"] + params["ba1"], 0.0)
    a2 = jnp.tanh(a1 @ params["wa2"] + params["ba2"])
    logits = (a2 @ params["wa3"] + params["ba3"]).reshape(b, l)
    mask = jnp.arange(l)[None, :] >= chunk_lengths[:, None]
    logits = jnp.where(mask, -jnp.inf, logits)
    alpha = jax.nn.softmax(logits, axis=1)
    weighted = jnp.einsum("bl,blf->bf", alpha, h_seq)
    r1 = jnp.maximum(weighted @ params["wr1"] + params["br1"], 0.0)
    out = jax.nn.sigmoid(r1 @ params["wr2"] + params["br2"])
    return out, alpha


if __name__ == "__main__":
    key = jax.random.PRNGKey(0)
    kp, kx = jax.random.split(key)
    params = init_params(kp)

    B, L_MAX = 2, 16
    x = jax.random.normal(kx, (B, L_MAX, N_MELS, CHUNK_FRAMES), dtype=jnp.float32)
    chunk_lengths = jnp.array([16, 11], dtype=jnp.int32)

    fwd = jax.jit(music_highlighter_forward)
    out, alpha = fwd(params, x, chunk_lengths)
    out = jax.block_until_ready(out)
    alpha = jax.block_until_ready(alpha)

    ref_out, ref_alpha = reference_forward(params, x, chunk_lengths)
    np.testing.assert_allclose(np.asarray(out), np.asarray(ref_out), rtol=2e-3, atol=2e-3)
    np.testing.assert_allclose(np.asarray(alpha), np.asarray(ref_alpha), rtol=2e-3, atol=2e-3)

    print("KERNEL_OK")
</pallas_src>

<mosaic_0001>
module attributes {stable_mosaic.version = 11 : i64} {
  func.func @_conv_tower_kernel(%arg0: i32, %arg1: memref<16x512xbf16, #tpu.memory_space<vmem>>, %arg2: memref<512x128xbf16, #tpu.memory_space<vmem>>, %arg3: memref<128x128xbf16, #tpu.memory_space<vmem>>, %arg4: memref<128x256xbf16, #tpu.memory_space<vmem>>, %arg5: memref<3x256xf32, #tpu.memory_space<vmem>>, %arg6: memref<16x128xbf16, #tpu.memory_space<vmem>>) attributes {dimension_semantics = [#tpu.dimension_semantics<parallel>], iteration_bounds = array<i64: 2>, scalar_prefetch = 0 : i64, scratch_operands = 0 : i64, tpu.core_type = #tpu.core_type<tc>, window_params = [{transform_indices = @transform_0, window_bounds = array<i64: 16, 512>}, {pipeline_mode = #tpu.pipeline_mode<synchronous>, transform_indices = @transform_1, window_bounds = array<i64: 512, 128>}, {pipeline_mode = #tpu.pipeline_mode<synchronous>, transform_indices = @transform_2, window_bounds = array<i64: 128, 128>}, {pipeline_mode = #tpu.pipeline_mode<synchronous>, transform_indices = @transform_3, window_bounds = array<i64: 128, 256>}, {pipeline_mode = #tpu.pipeline_mode<synchronous>, transform_indices = @transform_4, window_bounds = array<i64: 3, 256>}, {transform_indices = @transform_5, window_bounds = array<i64: 16, 128>}]} {
    %c0 = arith.constant 0 : index
    %c0_0 = arith.constant 0 : index
    %0 = vector.load %arg5[%c0, %c0_0] : memref<3x256xf32, #tpu.memory_space<vmem>>, vector<3x256xf32>
    %c0_1 = arith.constant 0 : index
    %c0_2 = arith.constant 0 : index
    %1 = vector.load %arg1[%c0_1, %c0_2] : memref<16x512xbf16, #tpu.memory_space<vmem>>, vector<16x512xbf16>
    %c0_3 = arith.constant 0 : index
    %c0_4 = arith.constant 0 : index
    %2 = vector.load %arg2[%c0_3, %c0_4] : memref<512x128xbf16, #tpu.memory_space<vmem>>, vector<512x128xbf16>
    %cst = arith.constant dense<0.000000e+00> : vector<16x128xf32>
    %3 = tpu.matmul %1, %2, %cst {dimension_numbers = #tpu.dot_dimension_numbers<[1], [0], [0], [1], [0, 0, 1, 1], [], []>} : vector<16x512xbf16>, vector<512x128xbf16>, vector<16x128xf32> -> vector<16x128xf32>
    %4 = vector.extract_strided_slice %0 {offsets = [0, 0], sizes = [1, 128], strides = [1, 1]} : vector<3x256xf32> to vector<1x128xf32>
    %5 = vector.broadcast %4 : vector<1x128xf32> to vector<16x128xf32>
    %6 = arith.addf %3, %5 : vector<16x128xf32>
    %cst_5 = arith.constant 0.000000e+00 : f32
    %7 = vector.broadcast %cst_5 : f32 to vector<16x128xf32>
    %8 = arith.maximumf %6, %7 : vector<16x128xf32>
    %9 = arith.truncf %8 : vector<16x128xf32> to vector<16x128xbf16>
    %c0_6 = arith.constant 0 : index
    %c0_7 = arith.constant 0 : index
    %10 = vector.load %arg3[%c0_6, %c0_7] : memref<128x128xbf16, #tpu.memory_space<vmem>>, vector<128x128xbf16>
    %cst_8 = arith.constant dense<0.000000e+00> : vector<16x128xf32>
    %11 = tpu.matmul %9, %10, %cst_8 {dimension_numbers = #tpu.dot_dimension_numbers<[1], [0], [0], [1], [0, 0, 1, 1], [], []>} : vector<16x128xbf16>, vector<128x128xbf16>, vector<16x128xf32> -> vector<16x128xf32>
    %12 = vector.extract_strided_slice %0 {offsets = [1, 0], sizes = [1, 128], strides = [1, 1]} : vector<3x256xf32> to vector<1x128xf32>
    %13 = vector.broadcast %12 : vector<1x128xf32> to vector<16x128xf32>
    %14 = arith.addf %11, %13 : vector<16x128xf32>
    %cst_9 = arith.constant 0.000000e+00 : f32
    %15 = vector.broadcast %cst_9 : f32 to vector<16x128xf32>
    %16 = arith.maximumf %14, %15 : vector<16x128xf32>
    %17 = arith.truncf %16 : vector<16x128xf32> to vector<16x128xbf16>
    %c0_10 = arith.constant 0 : index
    %c0_11 = arith.constant 0 : index
    %18 = vector.load %arg4[%c0_10, %c0_11] : memref<128x256xbf16, #tpu.memory_space<vmem>>, vector<128x256xbf16>
    %cst_12 = arith.constant dense<0.000000e+00> : vector<16x256xf32>
    %19 = tpu.matmul %17, %18, %cst_12 {dimension_numbers = #tpu.dot_dimension_numbers<[1], [0], [0], [1], [0, 0, 1, 1], [], []>} : vector<16x128xbf16>, vector<128x256xbf16>, vector<16x256xf32> -> vector<16x256xf32>
    %20 = vector.extract_strided_slice %0 {offsets = [2, 0], sizes = [1, 256], strides = [1, 1]} : vector<3x256xf32> to vector<1x256xf32>
    %21 = vector.broadcast %20 : vector<1x256xf32> to vector<16x256xf32>
    %22 = arith.addf %19, %21 : vector<16x256xf32>
    %cst_13 = arith.constant 0.000000e+00 : f32
    %23 = vector.broadcast %cst_13 : f32 to vector<16x256xf32>
    %24 = arith.maximumf %22, %23 : vector<16x256xf32>
    %25 = vector.extract_strided_slice %24 {offsets = [0, 0], sizes = [16, 128], strides = [1, 1]} : vector<16x256xf32> to vector<16x128xf32>
    %26 = vector.extract_strided_slice %24 {offsets = [0, 128], sizes = [16, 128], strides = [1, 1]} : vector<16x256xf32> to vector<16x128xf32>
    %27 = arith.maximumf %25, %26 : vector<16x128xf32>
    %28 = arith.truncf %27 : vector<16x128xf32> to vector<16x128xbf16>
    %c0_14 = arith.constant 0 : index
    %c0_15 = arith.constant 0 : index
    %29 = vector.load %arg6[%c0_14, %c0_15] : memref<16x128xbf16, #tpu.memory_space<vmem>>, vector<16x128xbf16>
    tpu.vector_store %arg6[%c0_14, %c0_15], %28 {strides = array<i32>} : memref<16x128xbf16, #tpu.memory_space<vmem>>, vector<16x128xbf16>,
    return
  }
  func.func @transform_0(%arg0: i32) -> (i32, i32) {
    %c0_i32 = arith.constant 0 : i32
    %c0_i32_0 = arith.constant 0 : i32
    return %arg0, %c0_i32 : i32, i32
  }
  func.func @transform_1(%arg0: i32) -> (i32, i32) {
    %c0_i32 = arith.constant 0 : i32
    %c0_i32_0 = arith.constant 0 : i32
    %c0_i32_1 = arith.constant 0 : i32
    return %c0_i32, %c0_i32_0 : i32, i32
  }
  func.func @transform_2(%arg0: i32) -> (i32, i32) {
    %c0_i32 = arith.constant 0 : i32
    %c0_i32_0 = arith.constant 0 : i32
    %c0_i32_1 = arith.constant 0 : i32
    return %c0_i32, %c0_i32_0 : i32, i32
  }
  func.func @transform_3(%arg0: i32) -> (i32, i32) {
    %c0_i32 = arith.constant 0 : i32
    %c0_i32_0 = arith.constant 0 : i32
    %c0_i32_1 = arith.constant 0 : i32
    return %c0_i32, %c0_i32_0 : i32, i32
  }
  func.func @transform_4(%arg0: i32) -> (i32, i32) {
    %c0_i32 = arith.constant 0 : i32
    %c0_i32_0 = arith.constant 0 : i32
    %c0_i32_1 = arith.constant 0 : i32
    return %c0_i32, %c0_i32_0 : i32, i32
  }
  func.func @transform_5(%arg0: i32) -> (i32, i32) {
    %c0_i32 = arith.constant 0 : i32
    %c0_i32_0 = arith.constant 0 : i32
    return %arg0, %c0_i32 : i32, i32
  }
}

module attributes {stable_mosaic.version = 11 : i64} {
  func.func @_attn_regr_kernel(%arg0: i32, %arg1: memref<32x128xbf16, #tpu.memory_space<vmem>>, %arg2: memref<32x128xf32, #tpu.memory_space<vmem>>, %arg3: memref<2x16x1xf32, #tpu.memory_space<vmem>>, %arg4: memref<128x256xf32, #tpu.memory_space<vmem>>, %arg5: memref<3x128xf32, #tpu.memory_space<vmem>>, %arg6: memref<128x128xf32, #tpu.memory_space<vmem>>, %arg7: memref<128x128xf32, #tpu.memory_space<vmem>>, %arg8: memref<2x128xf32, #tpu.memory_space<vmem>>, %arg9: memref<2x128xf32, #tpu.memory_space<vmem>>, %arg10: memref<2x16x1xf32, #tpu.memory_space<vmem>>) attributes {dimension_semantics = [#tpu.dimension_semantics<arbitrary>], iteration_bounds = array<i64: 1>, scalar_prefetch = 0 : i64, scratch_operands = 0 : i64, tpu.core_type = #tpu.core_type<tc>, window_params = [{pipeline_mode = #tpu.pipeline_mode<synchronous>, transform_indices = @transform_0, window_bounds = array<i64: 32, 128>}, {pipeline_mode = #tpu.pipeline_mode<synchronous>, transform_indices = @transform_1, window_bounds = array<i64: 32, 128>}, {pipeline_mode = #tpu.pipeline_mode<synchronous>, transform_indices = @transform_2, window_bounds = array<i64: 2, 16, 1>}, {pipeline_mode = #tpu.pipeline_mode<synchronous>, transform_indices = @transform_3, window_bounds = array<i64: 128, 256>}, {pipeline_mode = #tpu.pipeline_mode<synchronous>, transform_indices = @transform_4, window_bounds = array<i64: 3, 128>}, {pipeline_mode = #tpu.pipeline_mode<synchronous>, transform_indices = @transform_5, window_bounds = array<i64: 128, 128>}, {pipeline_mode = #tpu.pipeline_mode<synchronous>, transform_indices = @transform_6, window_bounds = array<i64: 128, 128>}, {pipeline_mode = #tpu.pipeline_mode<synchronous>, transform_indices = @transform_7, window_bounds = array<i64: 2, 128>}, {pipeline_mode = #tpu.pipeline_mode<synchronous>, transform_indices = @transform_8, window_bounds = array<i64: 2, 128>}, {pipeline_mode = #tpu.pipeline_mode<synchronous>, transform_indices = @transform_9, window_bounds = array<i64: 2, 16, 1>}]} {
    %c0 = arith.constant 0 : index
    %c0_0 = arith.constant 0 : index
    %0 = vector.load %arg1[%c0, %c0_0] : memref<32x128xbf16, #tpu.memory_space<vmem>>, vector<32x128xbf16>
    %1 = arith.extf %0 : vector<32x128xbf16> to vector<32x128xf32>
    %c0_1 = arith.constant 0 : index
    %c0_2 = arith.constant 0 : index
    %2 = vector.load %arg2[%c0_1, %c0_2] : memref<32x128xf32, #tpu.memory_space<vmem>>, vector<32x128xf32>
    %3 = arith.addf %1, %2 : vector<32x128xf32>
    %c0_3 = arith.constant 0 : index
    %c0_4 = arith.constant 0 : index
    %4 = vector.load %arg4[%c0_3, %c0_4] : memref<128x256xf32, #tpu.memory_space<vmem>>, vector<128x256xf32>
    %c0_5 = arith.constant 0 : index
    %c0_6 = arith.constant 0 : index
    %5 = vector.load %arg5[%c0_5, %c0_6] : memref<3x128xf32, #tpu.memory_space<vmem>>, vector<3x128xf32>
    %6 = vector.extract_strided_slice %4 {offsets = [0, 0], sizes = [128, 128], strides = [1, 1]} : vector<128x256xf32> to vector<128x128xf32>
    %cst = arith.constant dense<0.000000e+00> : vector<32x128xf32>
    %7 = tpu.matmul %3, %6, %cst {dimension_numbers = #tpu.dot_dimension_numbers<[1], [0], [0], [1], [0, 0, 1, 1], [], []>} : vector<32x128xf32>, vector<128x128xf32>, vector<32x128xf32> -> vector<32x128xf32>
    %8 = vector.extract_strided_slice %5 {offsets = [0, 0], sizes = [1, 128], strides = [1, 1]} : vector<3x128xf32> to vector<1x128xf32>
    %9 = vector.broadcast %8 : vector<1x128xf32> to vector<32x128xf32>
    %10 = arith.addf %7, %9 : vector<32x128xf32>
    %cst_7 = arith.constant 0.000000e+00 : f32
    %11 = vector.broadcast %cst_7 : f32 to vector<32x128xf32>
    %12 = arith.maximumf %10, %11 : vector<32x128xf32>
    %13 = vector.extract_strided_slice %4 {offsets = [0, 128], sizes = [128, 128], strides = [1, 1]} : vector<128x256xf32> to vector<128x128xf32>
    %cst_8 = arith.constant dense<0.000000e+00> : vector<32x128xf32>
    %14 = tpu.matmul %12, %13, %cst_8 {dimension_numbers = #tpu.dot_dimension_numbers<[1], [0], [0], [1], [0, 0, 1, 1], [], []>} : vector<32x128xf32>, vector<128x128xf32>, vector<32x128xf32> -> vector<32x128xf32>
    %15 = vector.extract_strided_slice %5 {offsets = [1, 0], sizes = [1, 128], strides = [1, 1]} : vector<3x128xf32> to vector<1x128xf32>
    %16 = vector.broadcast %15 : vector<1x128xf32> to vector<32x128xf32>
    %17 = arith.addf %14, %16 : vector<32x128xf32>
    %18 = math.tanh %17 : vector<32x128xf32>
    %19 = vector.extract_strided_slice %5 {offsets = [2, 0], sizes = [1, 128], strides = [1, 1]} : vector<3x128xf32> to vector<1x128xf32>
    %20 = vector.broadcast %19 : vector<1x128xf32> to vector<32x128xf32>
    %21 = arith.mulf %18, %20 : vector<32x128xf32>
    %cst_9 = arith.constant dense<0.000000e+00> : vector<32xf32>
    %22 = vector.multi_reduction <add>, %21, %cst_9 [1] : vector<32x128xf32> to vector<32xf32>
    %23 = vector.shape_cast %22 : vector<32xf32> to vector<32x1xf32>
    %c0_10 = arith.constant 0 : index
    %c0_11 = arith.constant 0 : index
    %c0_12 = arith.constant 0 : index
    %24 = vector.load %arg3[%c0_10, %c0_11, %c0_12] : memref<2x16x1xf32, #tpu.memory_space<vmem>>, vector<2x16x1xf32>
    %25 = vector.shape_cast %23 : vector<32x1xf32> to vector<2x16x1xf32>
    %cst_13 = arith.constant 1.000000e+00 : f32
    %26 = vector.broadcast %cst_13 : f32 to vector<2x16x1xf32>
    %27 = arith.subf %26, %24 : vector<2x16x1xf32>
    %cst_14 = arith.constant -1.000000e+30 : f32
    %28 = vector.broadcast %cst_14 : f32 to vector<2x16x1xf32>
    %29 = arith.mulf %27, %28 : vector<2x16x1xf32>
    %30 = arith.addf %25, %29 : vector<2x16x1xf32>
    %cst_15 = arith.constant dense<0xFF800000> : vector<2x1xf32>
    %31 = vector.multi_reduction <maximumf>, %30, %cst_15 [1] : vector<2x16x1xf32> to vector<2x1xf32>
    %32 = vector.shape_cast %31 : vector<2x1xf32> to vector<2x1x1xf32>
    %33 = vector.broadcast %32 : vector<2x1x1xf32> to vector<2x16x1xf32>
    %34 = arith.subf %30, %33 : vector<2x16x1xf32>
    %35 = math.exp %34 : vector<2x16x1xf32>
    %36 = arith.mulf %35, %24 : vector<2x16x1xf32>
    %cst_16 = arith.constant dense<0.000000e+00> : vector<2x1xf32>
    %37 = vector.multi_reduction <add>, %36, %cst_16 [1] : vector<2x16x1xf32> to vector<2x1xf32>
    %38 = vector.shape_cast %37 : vector<2x1xf32> to vector<2x1x1xf32>
    %39 = vector.broadcast %38 : vector<2x1x1xf32> to vector<2x16x1xf32>
    %40 = arith.divf %36, %39 : vector<2x16x1xf32>
    %c0_17 = arith.constant 0 : index
    %c0_18 = arith.constant 0 : index
    %c0_19 = arith.constant 0 : index
    %41 = vector.load %arg10[%c0_17, %c0_18, %c0_19] : memref<2x16x1xf32, #tpu.memory_space<vmem>>, vector<2x16x1xf32>
    tpu.vector_store %arg10[%c0_17, %c0_18, %c0_19], %40 {strides = array<i32>} : memref<2x16x1xf32, #tpu.memory_space<vmem>>, vector<2x16x1xf32>,
    %42 = vector.shape_cast %1 : vector<32x128xf32> to vector<2x16x128xf32>
    %43 = vector.broadcast %40 : vector<2x16x1xf32> to vector<2x16x128xf32>
    %44 = arith.mulf %43, %42 : vector<2x16x128xf32>
    %cst_20 = arith.constant dense<0.000000e+00> : vector<2x128xf32>
    %45 = vector.multi_reduction <add>, %44, %cst_20 [1] : vector<2x16x128xf32> to vector<2x128xf32>
    %c0_21 = arith.constant 0 : index
    %c0_22 = arith.constant 0 : index
    %46 = vector.load %arg8[%c0_21, %c0_22] : memref<2x128xf32, #tpu.memory_space<vmem>>, vector<2x128xf32>
    %c0_23 = arith.constant 0 : index
    %c0_24 = arith.constant 0 : index
    %47 = vector.load %arg6[%c0_23, %c0_24] : memref<128x128xf32, #tpu.memory_space<vmem>>, vector<128x128xf32>
    %cst_25 = arith.constant dense<0.000000e+00> : vector<2x128xf32>
    %48 = tpu.matmul %45, %47, %cst_25 {dimension_numbers = #tpu.dot_dimension_numbers<[1], [0], [0], [1], [0, 0, 1, 1], [], []>} : vector<2x128xf32>, vector<128x128xf32>, vector<2x128xf32> -> vector<2x128xf32>
    %49 = vector.extract_strided_slice %46 {offsets = [0, 0], sizes = [1, 128], strides = [1, 1]} : vector<2x128xf32> to vector<1x128xf32>
    %50 = vector.broadcast %49 : vector<1x128xf32> to vector<2x128xf32>
    %51 = arith.addf %48, %50 : vector<2x128xf32>
    %cst_26 = arith.constant 0.000000e+00 : f32
    %52 = vector.broadcast %cst_26 : f32 to vector<2x128xf32>
    %53 = arith.maximumf %51, %52 : vector<2x128xf32>
    %c0_27 = arith.constant 0 : index
    %c0_28 = arith.constant 0 : index
    %54 = vector.load %arg7[%c0_27, %c0_28] : memref<128x128xf32, #tpu.memory_space<vmem>>, vector<128x128xf32>
    %cst_29 = arith.constant dense<0.000000e+00> : vector<2x128xf32>
    %55 = tpu.matmul %53, %54, %cst_29 {dimension_numbers = #tpu.dot_dimension_numbers<[1], [0], [0], [1], [0, 0, 1, 1], [], []>} : vector<2x128xf32>, vector<128x128xf32>, vector<2x128xf32> -> vector<2x128xf32>
    %56 = vector.extract_strided_slice %46 {offsets = [1, 0], sizes = [1, 128], strides = [1, 1]} : vector<2x128xf32> to vector<1x128xf32>
    %57 = vector.broadcast %56 : vector<1x128xf32> to vector<2x128xf32>
    %58 = arith.addf %55, %57 : vector<2x128xf32>
    %59 = arith.negf %58 : vector<2x128xf32>
    %60 = math.exp %59 : vector<2x128xf32>
    %cst_30 = arith.constant 1.000000e+00 : f32
    %61 = vector.broadcast %cst_30 : f32 to vector<2x128xf32>
    %62 = arith.addf %61, %60 : vector<2x128xf32>
    %63 = arith.divf %61, %62 : vector<2x128xf32>
    %c0_31 = arith.constant 0 : index
    %c0_32 = arith.constant 0 : index
    %64 = vector.load %arg9[%c0_31, %c0_32] : memref<2x128xf32, #tpu.memory_space<vmem>>, vector<2x128xf32>
    tpu.vector_store %arg9[%c0_31, %c0_32], %63 {strides = array<i32>} : memref<2x128xf32, #tpu.memory_space<vmem>>, vector<2x128xf32>,
    return
  }
  func.func @transform_0(%arg0: i32) -> (i32, i32) {
    %c0_i32 = arith.constant 0 : i32
    %c0_i32_0 = arith.constant 0 : i32
    %c0_i32_1 = arith.constant 0 : i32
    return %c0_i32, %c0_i32_0 : i32, i32
  }
  func.func @transform_1(%arg0: i32) -> (i32, i32) {
    %c0_i32 = arith.constant 0 : i32
    %c0_i32_0 = arith.constant 0 : i32
    %c0_i32_1 = arith.constant 0 : i32
    return %c0_i32, %c0_i32_0 : i32, i32
  }
  func.func @transform_2(%arg0: i32) -> (i32, i32, i32) {
    %c0_i32 = arith.constant 0 : i32
    %c0_i32_0 = arith.constant 0 : i32
    %c0_i32_1 = arith.constant 0 : i32
    %c0_i32_2 = arith.constant 0 : i32
    return %c0_i32, %c0_i32_0, %c0_i32_1 : i32, i32, i32
  }
  func.func @transform_3(%arg0: i32) -> (i32, i32) {
    %c0_i32 = arith.constant 0 : i32
    %c0_i32_0 = arith.constant 0 : i32
    %c0_i32_1 = arith.constant 0 : i32
    return %c0_i32, %c0_i32_0 : i32, i32
  }
  func.func @transform_4(%arg0: i32) -> (i32, i32) {
    %c0_i32 = arith.constant 0 : i32
    %c0_i32_0 = arith.constant 0 : i32
    %c0_i32_1 = arith.constant 0 : i32
    return %c0_i32, %c0_i32_0 : i32, i32
  }
  func.func @transform_5(%arg0: i32) -> (i32, i32) {
    %c0_i32 = arith.constant 0 : i32
    %c0_i32_0 = arith.constant 0 : i32
    %c0_i32_1 = arith.constant 0 : i32
    return %c0_i32, %c0_i32_0 : i32, i32
  }
  func.func @transform_6(%arg0: i32) -> (i32, i32) {
    %c0_i32 = arith.constant 0 : i32
    %c0_i32_0 = arith.constant 0 : i32
    %c0_i32_1 = arith.constant 0 : i32
    return %c0_i32, %c0_i32_0 : i32, i32
  }
  func.func @transform_7(%arg0: i32) -> (i32, i32) {
    %c0_i32 = arith.constant 0 : i32
    %c0_i32_0 = arith.constant 0 : i32
    %c0_i32_1 = arith.constant 0 : i32
    return %c0_i32, %c0_i32_0 : i32, i32
  }
  func.func @transform_8(%arg0: i32) -> (i32, i32) {
    %c0_i32 = arith.constant 0 : i32
    %c0_i32_0 = arith.constant 0 : i32
    %c0_i32_1 = arith.constant 0 : i32
    return %c0_i32, %c0_i32_0 : i32, i32
  }
  func.func @transform_9(%arg0: i32) -> (i32, i32, i32) {
    %c0_i32 = arith.constant 0 : i32
    %c0_i32_0 = arith.constant 0 : i32
    %c0_i32_1 = arith.constant 0 : i32
    %c0_i32_2 = arith.constant 0 : i32
    return %c0_i32, %c0_i32_0, %c0_i32_1 : i32, i32, i32
  }
}

</mosaic_0001>

<llo_original>
// kernel: music_highlighter_forward.2
$region0: #{music_highlighter_forward.2}
  #allocation0 [shape = 'u32[]', space=smem, size = 0x4, offset = 0x4, fixed_abs, tag = 'smem constant byte address 0x4 - core index']
  #allocation1 [shape = 'u32[144,128]{1,0:T(1,128)}', space=vmem, size = 0x12000, scoped, tag = 'internal scratch']
  %s0 = inlined_call_operand.vmem [shape: bf16[32,512], index: 0, kind: input, shape index: {}]
  %s1 = inlined_call_operand.vmem [shape: bf16[512,128], index: 1, kind: input, shape index: {}]
  %s2 = inlined_call_operand.vmem [shape: bf16[128,128], index: 2, kind: input, shape index: {}]
  %s3 = inlined_call_operand.vmem [shape: bf16[128,256], index: 3, kind: input, shape index: {}]
  %s4 = inlined_call_operand.vmem [shape: f32[3,256], index: 4, kind: input, shape index: {}]
  %s5 = inlined_call_operand.vmem [shape: bf16[32,128], index: 5, kind: output, shape index: {}]
  %s6 = sld [smem:[#allocation0]]
  $region53: #{music_highlighter_forward.2} parent=0
    _
  %s8 = ssub.s32 1, %s6
  %s9 = scalar_select 0, %s8, %s6
  loop: start=0, step=1, limit=4
  $region2: #{music_highlighter_forward.2} parent=0 // loop_pre_header
    _
  $region3: #{music_highlighter_forward.2} parent=0 // loop_header
    %s11 = sphi 0, %s15
    %p12 = scmp.ge.s32.totalorder %s11, 4
    %s21 = sphi 0, %s23
    %s24 = sphi 0, %s21
    %s25 = sphi 0, %s24
    %s41 = sphi 0, %s25
    %s45 = sphi 0, %s45
    %s47 = sphi 0, %s45
    %s48 = sphi 0, %s47
    %s62 = sphi 0, %s48
    %s66 = sphi 0, %s66
    %s68 = sphi 0, %s66
    %s69 = sphi 0, %s68
    %s83 = sphi 0, %s69
    %s87 = sphi 0, %s87
    %s89 = sphi 0, %s87
    %s90 = sphi 0, %s89
    %s104 = sphi 0, %s90
    %s108 = sphi 0, %s108
    %s110 = sphi 0, %s108
    %s111 = sphi 0, %s110
    %s125 = sphi 0, %s111
    %s131 = sphi 0, %s133
    %s134 = sphi 0, %s131
    %s135 = sphi 0, %s134
    %s151 = sphi 0, %s135
  $region4: #{music_highlighter_forward.2} parent=0 // loop_header_branch
    %14 = sbr.rel (%p12) target = $region8
  $region5: #{music_highlighter_forward.2} parent=0 // loop_body
    %s16 = ssub.s32 %s11, 1
    %s17 = ssub.s32 %s11, 2
    %s18 = sadd.s32 %s11, 1
    %s19 = ssub.s32 %s11, %s18
    %p20 = scmp.eq.s32.totalorder %s19, 0
    %s22 = sadd.s32 %s21, 1
    %s23 = scalar_select %p20, %s21, %s22
    %p26 = pneg %p20
    %p27 = scmp.eq.s32.totalorder %s11, 1
    %p28 = por %p26, %p27
    %p29 = scmp.ne.s32.totalorder %s21, %s24
    %p30 = scmp.eq.s32.totalorder %s11, 0
    %p31 = por %p29, %p30
    %p32 = scmp.ne.s32.totalorder %s21, %s24
    %p33 = scmp.eq.s32.totalorder %s16, 1
    %p34 = por %p32, %p33
    %p35 = scmp.ne.s32.totalorder %s24, %s25
    %p36 = scmp.eq.s32.totalorder %s16, 0
    %p37 = por %p35, %p36
    %p38 = scmp.ne.s32.totalorder %s24, %s25
    %p39 = scmp.eq.s32.totalorder %s17, 1
    %p40 = por %p38, %p39
    %p42 = scmp.ne.s32.totalorder %s25, %s41
    %p43 = scmp.eq.s32.totalorder %s17, 0
    %p44 = por %p42, %p43
    %s46 = sadd.s32 %s45, 1
    %p49 = scmp.eq.s32.totalorder %s11, 1
    %p50 = scmp.ne.s32.totalorder %s45, %s47
    %p51 = scmp.eq.s32.totalorder %s11, 0
    %p52 = por %p50, %p51
    %p53 = scmp.ne.s32.totalorder %s45, %s47
    %p54 = scmp.eq.s32.totalorder %s16, 1
    %p55 = por %p53, %p54
    %p56 = scmp.ne.s32.totalorder %s47, %s48
    %p57 = scmp.eq.s32.totalorder %s16, 0
    %p58 = por %p56, %p57
    %p59 = scmp.ne.s32.totalorder %s47, %s48
    %p60 = scmp.eq.s32.totalorder %s17, 1
    %p61 = por %p59, %p60
    %p63 = scmp.ne.s32.totalorder %s48, %s62
    %p64 = scmp.eq.s32.totalorder %s17, 0
    %p65 = por %p63, %p64
    %s67 = sadd.s32 %s66, 1
    %p70 = scmp.eq.s32.totalorder %s11, 1
    %p71 = scmp.ne.s32.totalorder %s66, %s68
    %p72 = scmp.eq.s32.totalorder %s11, 0
    %p73 = por %p71, %p72
    %p74 = scmp.ne.s32.totalorder %s66, %s68
    %p75 = scmp.eq.s32.totalorder %s16, 1
    %p76 = por %p74, %p75
    %p77 = scmp.ne.s32.totalorder %s68, %s69
    %p78 = scmp.eq.s32.totalorder %s16, 0
    %p79 = por %p77, %p78
    %p80 = scmp.ne.s32.totalorder %s68, %s69
    %p81 = scmp.eq.s32.totalorder %s17, 1
    %p82 = por %p80, %p81
    %p84 = scmp.ne.s32.totalorder %s69, %s83
    %p85 = scmp.eq.s32.totalorder %s17, 0
    %p86 = por %p84, %p85
    %s88 = sadd.s32 %s87, 1
    %p91 = scmp.eq.s32.totalorder %s11, 1
    %p92 = scmp.ne.s32.totalorder %s87, %s89
    %p93 = scmp.eq.s32.totalorder %s11, 0
    %p94 = por %p92, %p93
    %p95 = scmp.ne.s32.totalorder %s87, %s89
    %p96 = scmp.eq.s32.totalorder %s16, 1
    %p97 = por %p95, %p96
    %p98 = scmp.ne.s32.totalorder %s89, %s90
    %p99 = scmp.eq.s32.totalorder %s16, 0
    %p100 = por %p98, %p99
    %p101 = scmp.ne.s32.totalorder %s89, %s90
    %p102 = scmp.eq.s32.totalorder %s17, 1
    %p103 = por %p101, %p102
    %p105 = scmp.ne.s32.totalorder %s90, %s104
    %p106 = scmp.eq.s32.totalorder %s17, 0
    %p107 = por %p105, %p106
    %s109 = sadd.s32 %s108, 1
    %p112 = scmp.eq.s32.totalorder %s11, 1
    %p113 = scmp.ne.s32.totalorder %s108, %s110
    %p114 = scmp.eq.s32.totalorder %s11, 0
    %p115 = por %p113, %p114
    %p116 = scmp.ne.s32.totalorder %s108, %s110
    %p117 = scmp.eq.s32.totalorder %s16, 1
    %p118 = por %p116, %p117
    %p119 = scmp.ne.s32.totalorder %s110, %s111
    %p120 = scmp.eq.s32.totalorder %s16, 0
    %p121 = por %p119, %p120
    %p122 = scmp.ne.s32.totalorder %s110, %s111
    %p123 = scmp.eq.s32.totalorder %s17, 1
    %p124 = por %p122, %p123
    %p126 = scmp.ne.s32.totalorder %s111, %s125
    %p127 = scmp.eq.s32.totalorder %s17, 0
    %p128 = por %p126, %p127
    %s129 = ssub.s32 %s11, %s18
    %p130 = scmp.eq.s32.totalorder %s129, 0
    %s132 = sadd.s32 %s131, 1
    %s133 = scalar_select %p130, %s131, %s132
    %p136 = pneg %p130
    %p137 = scmp.eq.s32.totalorder %s11, 1
    %p138 = por %p136, %p137
    %p139 = scmp.ne.s32.totalorder %s131, %s134
    %p140 = scmp.eq.s32.totalorder %s11, 0
    %p141 = por %p139, %p140
    %p142 = scmp.ne.s32.totalorder %s131, %s134
    %p143 = scmp.eq.s32.totalorder %s16, 1
    %p144 = por %p142, %p143
    %p145 = scmp.ne.s32.totalorder %s134, %s135
    %p146 = scmp.eq.s32.totalorder %s16, 0
    %p147 = por %p145, %p146
    %p148 = scmp.ne.s32.totalorder %s134, %s135
    %p149 = scmp.eq.s32.totalorder %s17, 1
    %p150 = por %p148, %p149
    %p152 = scmp.ne.s32.totalorder %s135, %s151
    %p153 = scmp.eq.s32.totalorder %s17, 0
    %p154 = por %p152, %p153
    %p155 = scmp.le.s32.totalorder 1, %s11
    %p156 = scmp.lt.s32.totalorder %s11, 3
    %p157 = pnand %p155, %p156
    %p158 = pneg %p157
    // Predicated region
    $region9: #{music_highlighter_forward.2} parent=5 // pred_check
      _
    $region10: #{music_highlighter_forward.2} parent=5 // pred_check_branch
      %160 = sbr.rel (%p157) target = $region12
    $region11: #{music_highlighter_forward.2} parent=5 // pred_region
      %s161 = ssub.s32 %s11, 1
      // Predicated region
      $region13: #{music_highlighter_forward.2} parent=11 // pred_check
        %p162 = pneg %p58
      $region14: #{music_highlighter_forward.2} parent=11 // pred_check_branch
        %164 = sbr.rel (%p162) target = $region16
      $region15: #{music_highlighter_forward.2} parent=11 // pred_region
        _
      $region16: #{music_highlighter_forward.2} parent=11 // pred_fallthru
        _
      // Predicated region
      $region17: #{music_highlighter_forward.2} parent=11 // pred_check
        %p165 = pneg %p79
      $region18: #{music_highlighter_forward.2} parent=11 // pred_check_branch
        %167 = sbr.rel (%p165) target = $region20
      $region19: #{music_highlighter_forward.2} parent=11 // pred_region
        _
      $region20: #{music_highlighter_forward.2} parent=11 // pred_fallthru
        _
      // Predicated region
      $region21: #{music_highlighter_forward.2} parent=11 // pred_check
        %p168 = pneg %p100
      $region22: #{music_highlighter_forward.2} parent=11 // pred_check_branch
        %170 = sbr.rel (%p168) target = $region24
      $region23: #{music_highlighter_forward.2} parent=11 // pred_region
        _
      $region24: #{music_highlighter_forward.2} parent=11 // pred_fallthru
        _
      // Predicated region
      $region25: #{music_highlighter_forward.2} parent=11 // pred_check
        %p171 = pneg %p121
      $region26: #{music_highlighter_forward.2} parent=11 // pred_check_branch
        %173 = sbr.rel (%p171) target = $region28
      $region27: #{music_highlighter_forward.2} parent=11 // pred_region
        _
      $region28: #{music_highlighter_forward.2} parent=11 // pred_fallthru
        _
    $region12: #{music_highlighter_forward.2} parent=5 // pred_fallthru
      _
    %p174 = scmp.lt.s32.totalorder %s11, 2
    // Predicated region
    $region29: #{music_highlighter_forward.2} parent=5 // pred_check
      %p175 = pneg %p174
    $region30: #{music_highlighter_forward.2} parent=5 // pred_check_branch
      %177 = sbr.rel (%p175) target = $region32
    $region31: #{music_highlighter_forward.2} parent=5 // pred_region
      // Predicated region
      $region33: #{music_highlighter_forward.2} parent=31 // pred_check
        %p178 = pneg %p31
      $region34: #{music_highlighter_forward.2} parent=31 // pred_check_branch
        %180 = sbr.rel (%p178) target = $region36
      $region35: #{music_highlighter_forward.2} parent=31 // pred_region
        %s181 = smul.u32 2, %s11
        %p182 = scmp.lt.s32.totalorder %s181, 3
        %s183 = scalar_select %p182, %s181, 3
        %s184 = smul.addr %s183, 4
        %s185 = smul.addr %s184, 4
        %s186 = scalar_lea.vmem %s0, %s185
        %s187 = smul.u32 2, %s11
      $region36: #{music_highlighter_forward.2} parent=31 // pred_fallthru
        _
    $region32: #{music_highlighter_forward.2} parent=5 // pred_fallthru
      _
    %p188 = scmp.le.s32.totalorder 1, %s11
    %p189 = scmp.lt.s32.totalorder %s11, 3
    %p190 = pnand %p188, %p189
    %p191 = pneg %p190
    // Predicated region
    $region37: #{music_highlighter_forward.2} parent=5 // pred_check
      _
    $region38: #{music_highlighter_forward.2} parent=5 // pred_check_branch
      %193 = sbr.rel (%p190) target = $region40
    $region39: #{music_highlighter_forward.2} parent=5 // pred_region
      %s194 = ssub.s32 %s11, 1
      %s195 = smul.u32 2, %s16
      %p196 = scmp.lt.s32.totalorder %s195, 3
      %s197 = scalar_select %p196, %s195, 3
      %s198 = smul.addr %s197, 4
      %s199 = smul.addr %s198, 4
      %s200 = scalar_lea.vmem %s0, %s199
      %p201 = pneg %p37
      %p202 = pneg %p34
      %p203 = pneg %p58
      %p204 = pneg %p55
      %p205 = pneg %p79
      %p206 = pneg %p76
      %p207 = pneg %p100
      %p208 = pneg %p97
      %p209 = pneg %p121
      %p210 = pneg %p118
      %p211 = pneg %p147
      %p212 = pneg %p144
      %s213 = smul.u32 2, %s16
      %p214 = scmp.lt.s32.totalorder %s213, 3
      %s215 = scalar_select %p214, %s213, 3
      %s216 = smul.addr %s215, 4
      %s217 = scalar_lea.vmem %s5, %s216
      %s218 = smul.u32 2, %s16
      %p219 = scmp.lt.s32.totalorder %s218, 3
      %s220 = scalar_select %p219, %s218, 3
      %s221 = smul.addr %s220, 4
      %s222 = smul.addr %s221, 4
      %s223 = scalar_lea.vmem %s0, %s222
      %s224 = smul.u32 2, %s16
      %s225 = smul.u32 2, %s16
      %p226 = scmp.lt.s32.totalorder %s225, 3
      %s227 = scalar_select %p226, %s225, 3
      %s228 = smul.addr %s227, 4
      %s229 = scalar_lea.vmem %s5, %s228
      %s230 = smul.u32 2, %s16
      %v232 = vld [vmem:[%s4] sm:$0x77]
      %v233 = vld [vmem:[%s223] sm:$0xff]
      %v234 = vld [vmem:[%s223 + $0x8] sm:$0xff]
      %v235 = vld [vmem:[%s223 + $0x10] sm:$0xff]
      %v236 = vld [vmem:[%s223 + $0x18] sm:$0xff]
      %v237 = vld [vmem:[%s1] sm:$0xf]
      %v238 = vld [vmem:[%s1 + $0x4] sm:$0xf]
      %v239 = vld [vmem:[%s1 + $0x8] sm:$0xf]
      %v240 = vld [vmem:[%s1 + $0xc] sm:$0xf]
      %v241 = vld [vmem:[%s1 + $0x10] sm:$0xf]
      %v242 = vld [vmem:[%s1 + $0x14] sm:$0xf]
      %v243 = vld [vmem:[%s1 + $0x18] sm:$0xf]
      %v244 = vld [vmem:[%s1 + $0x1c] sm:$0xf]
      %v245 = vld [vmem:[%s1 + $0x20] sm:$0xf]
      %v246 = vld [vmem:[%s1 + $0x24] sm:$0xf]
      %v247 = vld [vmem:[%s1 + $0x28] sm:$0xf]
      %v248 = vld [vmem:[%s1 + $0x2c] sm:$0xf]
      %v249 = vld [vmem:[%s1 + $0x30] sm:$0xf]
      %v250 = vld [vmem:[%s1 + $0x34] sm:$0xf]
      %v251 = vld [vmem:[%s1 + $0x38] sm:$0xf]
      %v252 = vld [vmem:[%s1 + $0x3c] sm:$0xf]
      %v253 = vld [vmem:[%s1 + $0x40] sm:$0xf]
      %v254 = vld [vmem:[%s1 + $0x44] sm:$0xf]
      %v255 = vld [vmem:[%s1 + $0x48] sm:$0xf]
      %v256 = vld [vmem:[%s1 + $0x4c] sm:$0xf]
      %v257 = vld [vmem:[%s1 + $0x50] sm:$0xf]
      %v258 = vld [vmem:[%s1 + $0x54] sm:$0xf]
      %v259 = vld [vmem:[%s1 + $0x58] sm:$0xf]
      %v260 = vld [vmem:[%s1 + $0x5c] sm:$0xf]
      %v261 = vld [vmem:[%s1 + $0x60] sm:$0xf]
      %v262 = vld [vmem:[%s1 + $0x64] sm:$0xf]
      %v263 = vld [vmem:[%s1 + $0x68] sm:$0xf]
      %v264 = vld [vmem:[%s1 + $0x6c] sm:$0xf]
      %v265 = vld [vmem:[%s1 + $0x70] sm:$0xf]
      %v266 = vld [vmem:[%s1 + $0x74] sm:$0xf]
      %v267 = vld [vmem:[%s1 + $0x78] sm:$0xf]
      %v268 = vld [vmem:[%s1 + $0x7c] sm:$0xf]
      %v269 = vld [vmem:[%s1 + $0x80] sm:$0xf]
      %v270 = vld [vmem:[%s1 + $0x84] sm:$0xf]
      %v271 = vld [vmem:[%s1 + $0x88] sm:$0xf]
      %v272 = vld [vmem:[%s1 + $0x8c] sm:$0xf]
      %v273 = vld [vmem:[%s1 + $0x90] sm:$0xf]
      %v274 = vld [vmem:[%s1 + $0x94] sm:$0xf]
      %v275 = vld [vmem:[%s1 + $0x98] sm:$0xf]
      %v276 = vld [vmem:[%s1 + $0x9c] sm:$0xf]
      %v277 = vld [vmem:[%s1 + $0xa0] sm:$0xf]
      %v278 = vld [vmem:[%s1 + $0xa4] sm:$0xf]
      %v279 = vld [vmem:[%s1 + $0xa8] sm:$0xf]
      %v280 = vld [vmem:[%s1 + $0xac] sm:$0xf]
      %v281 = vld [vmem:[%s1 + $0xb0] sm:$0xf]
      %v282 = vld [vmem:[%s1 + $0xb4] sm:$0xf]
      %v283 = vld [vmem:[%s1 + $0xb8] sm:$0xf]
      %v284 = vld [vmem:[%s1 + $0xbc] sm:$0xf]
      %v285 = vld [vmem:[%s1 + $0xc0] sm:$0xf]
      %v286 = vld [vmem:[%s1 + $0xc4] sm:$0xf]
      %v287 = vld [vmem:[%s1 + $0xc8] sm:$0xf]
      %v288 = vld [vmem:[%s1 + $0xcc] sm:$0xf]
      %v289 = vld [vmem:[%s1 + $0xd0] sm:$0xf]
      %v290 = vld [vmem:[%s1 + $0xd4] sm:$0xf]
      %v291 = vld [vmem:[%s1 + $0xd8] sm:$0xf]
      %v292 = vld [vmem:[%s1 + $0xdc] sm:$0xf]
      %v293 = vld [vmem:[%s1 + $0xe0] sm:$0xf]
      %v294 = vld [vmem:[%s1 + $0xe4] sm:$0xf]
      %v295 = vld [vmem:[%s1 + $0xe8] sm:$0xf]
      %v296 = vld [vmem:[%s1 + $0xec] sm:$0xf]
      %v297 = vld [vmem:[%s1 + $0xf0] sm:$0xf]
      %v298 = vld [vmem:[%s1 + $0xf4] sm:$0xf]
      %v299 = vld [vmem:[%s1 + $0xf8] sm:$0xf]
      %v300 = vld [vmem:[%s1 + $0xfc] sm:$0xf]
      %v301 = vlaneseq
      %v302 = vshrl.u32 %v301, 7
      %v303 = vsub.s32 0, %v302
      %v304 = vrot.slane %v232, %v303
      %v309 = vunpack.c.l.b16 %v233
      %v310 = vunpack.c.h.b16 %v233
      %v311 = vunpack.c.l.b16 %v234
      %v312 = vunpack.c.h.b16 %v234
      %v313 = vunpack.c.l.b16 %v235
      %v314 = vunpack.c.h.b16 %v235
      %v315 = vunpack.c.l.b16 %v236
      %v316 = vunpack.c.h.b16 %v236
      %v317 = vpack.c.b16 %v313, %v309
      %v318 = vpack.c.b16 %v314, %v310
      %v319 = vpack.c.b16 %v315, %v311
      %v320 = vpack.c.b16 %v316, %v312
      %v389 = vunpack.c.l.b16 %v237
      %v390 = vunpack.c.l.b16 %v238
      %v391 = vunpack.c.l.b16 %v239
      %v392 = vunpack.c.l.b16 %v240
      %v393 = vunpack.c.l.b16 %v241
      %v394 = vunpack.c.l.b16 %v242
      %v395 = vunpack.c.l.b16 %v243
      %v396 = vunpack.c.l.b16 %v244
      %v397 = vunpack.c.l.b16 %v245
      %v398 = vunpack.c.l.b16 %v246
      %v399 = vunpack.c.l.b16 %v247
      %v400 = vunpack.c.l.b16 %v248
      %v401 = vunpack.c.l.b16 %v249
      %v402 = vunpack.c.l.b16 %v250
      %v403 = vunpack.c.l.b16 %v251
      %v404 = vunpack.c.l.b16 %v252
      %v405 = vunpack.c.l.b16 %v253
      %v406 = vunpack.c.l.b16 %v254
      %v407 = vunpack.c.l.b16 %v255
      %v408 = vunpack.c.l.b16 %v256
      %v409 = vunpack.c.l.b16 %v257
      %v410 = vunpack.c.l.b16 %v258
      %v411 = vunpack.c.l.b16 %v259
      %v412 = vunpack.c.l.b16 %v260
      %v413 = vunpack.c.l.b16 %v261
      %v414 = vunpack.c.l.b16 %v262
      %v415 = vunpack.c.l.b16 %v263
      %v416 = vunpack.c.l.b16 %v264
      %v417 = vunpack.c.l.b16 %v265
      %v418 = vunpack.c.l.b16 %v266
      %v419 = vunpack.c.l.b16 %v267
      %v420 = vunpack.c.l.b16 %v268
      %v421 = vunpack.c.l.b16 %v269
      %v422 = vunpack.c.l.b16 %v270
      %v423 = vunpack.c.l.b16 %v271
      %v424 = vunpack.c.l.b16 %v272
      %v425 = vunpack.c.l.b16 %v273
      %v426 = vunpack.c.l.b16 %v274
      %v427 = vunpack.c.l.b16 %v275
      %v428 = vunpack.c.l.b16 %v276
      %v429 = vunpack.c.l.b16 %v277
      %v430 = vunpack.c.l.b16 %v278
      %v431 = vunpack.c.l.b16 %v279
      %v432 = vunpack.c.l.b16 %v280
      %v433 = vunpack.c.l.b16 %v281
      %v434 = vunpack.c.l.b16 %v282
      %v435 = vunpack.c.l.b16 %v283
      %v436 = vunpack.c.l.b16 %v284
      %v437 = vunpack.c.l.b16 %v285
      %v438 = vunpack.c.l.b16 %v286
      %v439 = vunpack.c.l.b16 %v287
      %v440 = vunpack.c.l.b16 %v288
      %v441 = vunpack.c.l.b16 %v289
      %v442 = vunpack.c.l.b16 %v290
      %v443 = vunpack.c.l.b16 %v291
      %v444 = vunpack.c.l.b16 %v292
      %v445 = vunpack.c.l.b16 %v293
      %v446 = vunpack.c.l.b16 %v294
      %v447 = vunpack.c.l.b16 %v295
      %v448 = vunpack.c.l.b16 %v296
      %v449 = vunpack.c.l.b16 %v297
      %v450 = vunpack.c.l.b16 %v298
      %v451 = vunpack.c.l.b16 %v299
      %v452 = vunpack.c.l.b16 %v300
      %v453 = vpack.c.b16 %v390, %v389
      %v454 = vpack.c.b16 %v392, %v391
      %v455 = vpack.c.b16 %v394, %v393
      %v456 = vpack.c.b16 %v396, %v395
      %v457 = vpack.c.b16 %v398, %v397
      %v458 = vpack.c.b16 %v400, %v399
      %v459 = vpack.c.b16 %v402, %v401
      %v460 = vpack.c.b16 %v404, %v403
      %v461 = vpack.c.b16 %v406, %v405
      %v462 = vpack.c.b16 %v408, %v407
      %v463 = vpack.c.b16 %v410, %v409
      %v464 = vpack.c.b16 %v412, %v411
      %v465 = vpack.c.b16 %v414, %v413
      %v466 = vpack.c.b16 %v416, %v415
      %v467 = vpack.c.b16 %v418, %v417
      %v468 = vpack.c.b16 %v420, %v419
      %v469 = vpack.c.b16 %v422, %v421
      %v470 = vpack.c.b16 %v424, %v423
      %v471 = vpack.c.b16 %v426, %v425
      %v472 = vpack.c.b16 %v428, %v427
      %v473 = vpack.c.b16 %v430, %v429
      %v474 = vpack.c.b16 %v432, %v431
      %v475 = vpack.c.b16 %v434, %v433
      %v476 = vpack.c.b16 %v436, %v435
      %v477 = vpack.c.b16 %v438, %v437
      %v478 = vpack.c.b16 %v440, %v439
      %v479 = vpack.c.b16 %v442, %v441
      %v480 = vpack.c.b16 %v444, %v443
      %v481 = vpack.c.b16 %v446, %v445
      %v482 = vpack.c.b16 %v448, %v447
      %v483 = vpack.c.b16 %v450, %v449
      %v484 = vpack.c.b16 %v452, %v451
      %517 = vmatprep.subr.bf16.mxu0 0
      %518 = vmatpush1.bf16.msra.mxu0 %v453
      %519 = vmatprep.subr.bf16.mxu0 0
      %520 = vmatpush1.bf16.msra.mxu0 %v454
      %521 = vmatprep.subr.bf16.mxu0 0
      %522 = vmatpush1.bf16.msra.mxu0 %v455
      %523 = vmatprep.subr.bf16.mxu0 0
      %524 = vmatpush1.bf16.msra.mxu0 %v456
      %525 = vmatprep.subr.bf16.mxu0 0
      %526 = vmatpush1.bf16.msra.mxu0 %v457
      %527 = vmatprep.subr.bf16.mxu0 0
      %528 = vmatpush1.bf16.msra.mxu0 %v458
      %529 = vmatprep.subr.bf16.mxu0 0
      %530 = vmatpush1.bf16.msra.mxu0 %v459
      %531 = vmatprep.subr.bf16.mxu0 0
      %532 = vmatpush1.bf16.msra.mxu0 %v460
      %533 = vmatprep.subr.bf16.mxu0 0
      %534 = vmatpush1.bf16.msra.mxu0 %v461
      %535 = vmatprep.subr.bf16.mxu0 0
      %536 = vmatpush1.bf16.msra.mxu0 %v462
      %537 = vmatprep.subr.bf16.mxu0 0
      %538 = vmatpush1.bf16.msra.mxu0 %v463
      %539 = vmatprep.subr.bf16.mxu0 0
      %540 = vmatpush1.bf16.msra.mxu0 %v464
      %541 = vmatprep.subr.bf16.mxu0 0
      %542 = vmatpush1.bf16.msra.mxu0 %v465
      %543 = vmatprep.subr.bf16.mxu0 0
      %544 = vmatpush1.bf16.msra.mxu0 %v466
      %545 = vmatprep.subr.bf16.mxu0 0
      %546 = vmatpush1.bf16.msra.mxu0 %v467
      %547 = vmatprep.subr.bf16.mxu0 0
      %548 = vmatpush1.bf16.msra.mxu0 %v468
      %549 = vmatprep.mubr.bf16.mxu0 %v318
      %550 = vmatmul.mubr.bf16.gmra.mrb[0].mxu0 %v317
      %v551 = vpop.f32.mrb[0].mxu0
      %v552 = vadd.f32 %v304, %v551
      %v553 = vpop.f32.mrb[0].mxu0
      %v554 = vpop.f32.mrb[0].mxu0
      %v555 = vadd.f32 %v304, %v554
      %v556 = vpop.f32.mrb[0].mxu0
      %557 = vdwg.mxu0
      %558 = vmatprep.subr.bf16.mxu0 0
      %559 = vmatpush1.bf16.msra.mxu0 %v469
      %560 = vmatprep.subr.bf16.mxu0 0
      %561 = vmatpush1.bf16.msra.mxu0 %v470
      %562 = vmatprep.subr.bf16.mxu0 0
      %563 = vmatpush1.bf16.msra.mxu0 %v471
      %564 = vmatprep.subr.bf16.mxu0 0
      %565 = vmatpush1.bf16.msra.mxu0 %v472
      %566 = vmatprep.subr.bf16.mxu0 0
      %567 = vmatpush1.bf16.msra.mxu0 %v473
      %568 = vmatprep.subr.bf16.mxu0 0
      %569 = vmatpush1.bf16.msra.mxu0 %v474
      %570 = vmatprep.subr.bf16.mxu0 0
      %571 = vmatpush1.bf16.msra.mxu0 %v475
      %572 = vmatprep.subr.bf16.mxu0 0
      %573 = vmatpush1.bf16.msra.mxu0 %v476
      %574 = vmatprep.subr.bf16.mxu0 0
      %575 = vmatpush1.bf16.msra.mxu0 %v477
      %576 = vmatprep.subr.bf16.mxu0 0
      %577 = vmatpush1.bf16.msra.mxu0 %v478
      %578 = vmatprep.subr.bf16.mxu0 0
      %579 = vmatpush1.bf16.msra.mxu0 %v479
      %580 = vmatprep.subr.bf16.mxu0 0
      %581 = vmatpush1.bf16.msra.mxu0 %v480
      %582 = vmatprep.subr.bf16.mxu0 0
      %583 = vmatpush1.bf16.msra.mxu0 %v481
      %584 = vmatprep.subr.bf16.mxu0 0
      %585 = vmatpush1.bf16.msra.mxu0 %v482
      %586 = vmatprep.subr.bf16.mxu0 0
      %587 = vmatpush1.bf16.msra.mxu0 %v483
      %588 = vmatprep.subr.bf16.mxu0 0
      %589 = vmatpush1.bf16.msra.mxu0 %v484
      %590 = vmatprep.mubr.bf16.mxu0 %v320
      %591 = vmatmul.mubr.bf16.gmra.mrb[0].mxu0 %v319
      %v592 = vpop.f32.mrb[0].mxu0
      %v593 = vadd.f32 %v552, %v592
      %v594 = vpop.f32.mrb[0].mxu0
      %v595 = vpop.f32.mrb[0].mxu0
      %v596 = vadd.f32 %v555, %v595
      %v597 = vpop.f32.mrb[0].mxu0
      %598 = vdwg.mxu0
      %v599 = vmax.f32 %v593, 0.0
      %v600 = vmax.f32 %v596, 0.0
      %v601 = vpack.c.bf16 %v600, %v599
      %v602 = vld [vmem:[%s2] sm:$0xf]
      %v603 = vld [vmem:[%s2 + $0x4] sm:$0xf]
      %v604 = vld [vmem:[%s2 + $0x8] sm:$0xf]
      %v605 = vld [vmem:[%s2 + $0xc] sm:$0xf]
      %v606 = vld [vmem:[%s2 + $0x10] sm:$0xf]
      %v607 = vld [vmem:[%s2 + $0x14] sm:$0xf]
      %v608 = vld [vmem:[%s2 + $0x18] sm:$0xf]
      %v609 = vld [vmem:[%s2 + $0x1c] sm:$0xf]
      %v610 = vld [vmem:[%s2 + $0x20] sm:$0xf]
      %v611 = vld [vmem:[%s2 + $0x24] sm:$0xf]
      %v612 = vld [vmem:[%s2 + $0x28] sm:$0xf]
      %v613 = vld [vmem:[%s2 + $0x2c] sm:$0xf]
      %v614 = vld [vmem:[%s2 + $0x30] sm:$0xf]
      %v615 = vld [vmem:[%s2 + $0x34] sm:$0xf]
      %v616 = vld [vmem:[%s2 + $0x38] sm:$0xf]
      %v617 = vld [vmem:[%s2 + $0x3c] sm:$0xf]
      %v618 = vlaneseq
      %v619 = vshrl.u32 %v618, 7
      %v620 = vsub.s32 1, %v619
      %v621 = vrot.slane %v232, %v620
      %v638 = vunpack.c.l.b16 %v602
      %v639 = vunpack.c.l.b16 %v603
      %v640 = vunpack.c.l.b16 %v604
      %v641 = vunpack.c.l.b16 %v605
      %v642 = vunpack.c.l.b16 %v606
      %v643 = vunpack.c.l.b16 %v607
      %v644 = vunpack.c.l.b16 %v608
      %v645 = vunpack.c.l.b16 %v609
      %v646 = vunpack.c.l.b16 %v610
      %v647 = vunpack.c.l.b16 %v611
      %v648 = vunpack.c.l.b16 %v612
      %v649 = vunpack.c.l.b16 %v613
      %v650 = vunpack.c.l.b16 %v614
      %v651 = vunpack.c.l.b16 %v615
      %v652 = vunpack.c.l.b16 %v616
      %v653 = vunpack.c.l.b16 %v617
      %v654 = vpack.c.b16 %v639, %v638
      %v655 = vpack.c.b16 %v641, %v640
      %v656 = vpack.c.b16 %v643, %v642
      %v657 = vpack.c.b16 %v645, %v644
      %v658 = vpack.c.b16 %v647, %v646
      %v659 = vpack.c.b16 %v649, %v648
      %v660 = vpack.c.b16 %v651, %v650
      %v661 = vpack.c.b16 %v653, %v652
      %670 = vmatprep.subr.bf16.mxu0 0
      %671 = vmatpush1.bf16.msra.mxu0 %v654
      %672 = vmatprep.subr.bf16.mxu0 0
      %673 = vmatpush1.bf16.msra.mxu0 %v655
      %674 = vmatprep.subr.bf16.mxu0 0
      %675 = vmatpush1.bf16.msra.mxu0 %v656
      %676 = vmatprep.subr.bf16.mxu0 0
      %677 = vmatpush1.bf16.msra.mxu0 %v657
      %678 = vmatprep.subr.bf16.mxu0 0
      %679 = vmatpush1.bf16.msra.mxu0 %v658
      %680 = vmatprep.subr.bf16.mxu0 0
      %681 = vmatpush1.bf16.msra.mxu0 %v659
      %682 = vmatprep.subr.bf16.mxu0 0
      %683 = vmatpush1.bf16.msra.mxu0 %v660
      %684 = vmatprep.subr.bf16.mxu0 0
      %685 = vmatpush1.bf16.msra.mxu0 %v661
      %686 = vmatprep.subr.bf16.mxu0 0
      %687 = vmatpush1.bf16.msra.mxu0 0
      %688 = vmatprep.subr.bf16.mxu0 0
      %689 = vmatpush1.bf16.msra.mxu0 0
      %690 = vmatprep.subr.bf16.mxu0 0
      %691 = vmatpush1.bf16.msra.mxu0 0
      %692 = vmatprep.subr.bf16.mxu0 0
      %693 = vmatpush1.bf16.msra.mxu0 0
      %694 = vmatprep.subr.bf16.mxu0 0
      %695 = vmatpush1.bf16.msra.mxu0 0
      %696 = vmatprep.subr.bf16.mxu0 0
      %697 = vmatpush1.bf16.msra.mxu0 0
      %698 = vmatprep.subr.bf16.mxu0 0
      %699 = vmatpush1.bf16.msra.mxu0 0
      %700 = vmatprep.subr.bf16.mxu0 0
      %701 = vmatpush1.bf16.msra.mxu0 0
      %702 = vmatprep.mubr.bf16.mxu0 0
      %703 = vmatmul.mubr.bf16.gmra.mrb[0].mxu0 %v601
      %v704 = vpop.f32.mrb[0].mxu0
      %v705 = vadd.f32 %v621, %v704
      %v706 = vpop.f32.mrb[0].mxu0
      %v707 = vpop.f32.mrb[0].mxu0
      %v708 = vadd.f32 %v621, %v707
      %v709 = vpop.f32.mrb[0].mxu0
      %710 = vdwg.mxu0
      %v711 = vmax.f32 %v705, 0.0
      %v712 = vmax.f32 %v708, 0.0
      %v713 = vpack.c.bf16 %v712, %v711
      %v714 = vld [vmem:[%s3] sm:$0xff]
      %v715 = vld [vmem:[%s3 + $0x8] sm:$0xff]
      %v716 = vld [vmem:[%s3 + $0x10] sm:$0xff]
      %v717 = vld [vmem:[%s3 + $0x18] sm:$0xff]
      %v718 = vld [vmem:[%s3 + $0x20] sm:$0xff]
      %v719 = vld [vmem:[%s3 + $0x28] sm:$0xff]
      %v720 = vld [vmem:[%s3 + $0x30] sm:$0xff]
      %v721 = vld [vmem:[%s3 + $0x38] sm:$0xff]
      %v722 = vld [vmem:[%s3 + $0x40] sm:$0xff]
      %v723 = vld [vmem:[%s3 + $0x48] sm:$0xff]
      %v724 = vld [vmem:[%s3 + $0x50] sm:$0xff]
      %v725 = vld [vmem:[%s3 + $0x58] sm:$0xff]
      %v726 = vld [vmem:[%s3 + $0x60] sm:$0xff]
      %v727 = vld [vmem:[%s3 + $0x68] sm:$0xff]
      %v728 = vld [vmem:[%s3 + $0x70] sm:$0xff]
      %v729 = vld [vmem:[%s3 + $0x78] sm:$0xff]
      %v731 = vlaneseq
      %v732 = vshrl.u32 %v731, 7
      %v733 = vsub.s32 2, %v732
      %v734 = vrot.slane %v232, %v733
      %v735 = vlaneseq
      %v736 = vshrl.u32 %v735, 7
      %v737 = vsub.s32 6, %v736
      %v738 = vrot.slane %v232, %v737
      %v741 = vlaneseq
      %v742 = vshrl.u32 %v741, 7
      %v743 = vsub.s32 2, %v742
      %v744 = vrot.slane %v734, %v743
      %v745 = vlaneseq
      %v746 = vshrl.u32 %v745, 7
      %v747 = vsub.s32 2, %v746
      %v748 = vrot.slane %v738, %v747
      %v765 = vunpack.c.l.b16 %v714
      %v766 = vunpack.c.h.b16 %v714
      %v767 = vunpack.c.l.b16 %v715
      %v768 = vunpack.c.h.b16 %v715
      %v769 = vunpack.c.l.b16 %v716
      %v770 = vunpack.c.h.b16 %v716
      %v771 = vunpack.c.l.b16 %v717
      %v772 = vunpack.c.h.b16 %v717
      %v773 = vunpack.c.l.b16 %v718
      %v774 = vunpack.c.h.b16 %v718
      %v775 = vunpack.c.l.b16 %v719
      %v776 = vunpack.c.h.b16 %v719
      %v777 = vunpack.c.l.b16 %v720
      %v778 = vunpack.c.h.b16 %v720
      %v779 = vunpack.c.l.b16 %v721
      %v780 = vunpack.c.h.b16 %v721
      %v781 = vunpack.c.l.b16 %v722
      %v782 = vunpack.c.h.b16 %v722
      %v783 = vunpack.c.l.b16 %v723
      %v784 = vunpack.c.h.b16 %v723
      %v785 = vunpack.c.l.b16 %v724
      %v786 = vunpack.c.h.b16 %v724
      %v787 = vunpack.c.l.b16 %v725
      %v788 = vunpack.c.h.b16 %v725
      %v789 = vunpack.c.l.b16 %v726
      %v790 = vunpack.c.h.b16 %v726
      %v791 = vunpack.c.l.b16 %v727
      %v792 = vunpack.c.h.b16 %v727
      %v793 = vunpack.c.l.b16 %v728
      %v794 = vunpack.c.h.b16 %v728
      %v795 = vunpack.c.l.b16 %v729
      %v796 = vunpack.c.h.b16 %v729
      %v797 = vpack.c.b16 %v767, %v765
      %v798 = vpack.c.b16 %v768, %v766
      %v799 = vpack.c.b16 %v771, %v769
      %v800 = vpack.c.b16 %v772, %v770
      %v801 = vpack.c.b16 %v775, %v773
      %v802 = vpack.c.b16 %v776, %v774
      %v803 = vpack.c.b16 %v779, %v777
      %v804 = vpack.c.b16 %v780, %v778
      %v805 = vpack.c.b16 %v783, %v781
      %v806 = vpack.c.b16 %v784, %v782
      %v807 = vpack.c.b16 %v787, %v785
      %v808 = vpack.c.b16 %v788, %v786
      %v809 = vpack.c.b16 %v791, %v789
      %v810 = vpack.c.b16 %v792, %v790
      %v811 = vpack.c.b16 %v795, %v793
      %v812 = vpack.c.b16 %v796, %v794
      %829 = vmatprep.subr.bf16.mxu0 %v798
      %830 = vmatpush1.bf16.msra.mxu0 %v797
      %831 = vmatprep.subr.bf16.mxu0 %v800
      %832 = vmatpush1.bf16.msra.mxu0 %v799
      %833 = vmatprep.subr.bf16.mxu0 %v802
      %834 = vmatpush1.bf16.msra.mxu0 %v801
      %835 = vmatprep.subr.bf16.mxu0 %v804
      %836 = vmatpush1.bf16.msra.mxu0 %v803
      %837 = vmatprep.subr.bf16.mxu0 %v806
      %838 = vmatpush1.bf16.msra.mxu0 %v805
      %839 = vmatprep.subr.bf16.mxu0 %v808
      %840 = vmatpush1.bf16.msra.mxu0 %v807
      %841 = vmatprep.subr.bf16.mxu0 %v810
      %842 = vmatpush1.bf16.msra.mxu0 %v809
      %843 = vmatprep.subr.bf16.mxu0 %v812
      %844 = vmatpush1.bf16.msra.mxu0 %v811
      %845 = vmatprep.subr.bf16.mxu0 0
      %846 = vmatpush1.bf16.msra.mxu0 0
      %847 = vmatprep.subr.bf16.mxu0 0
      %848 = vmatpush1.bf16.msra.mxu0 0
      %849 = vmatprep.subr.bf16.mxu0 0
      %850 = vmatpush1.bf16.msra.mxu0 0
      %851 = vmatprep.subr.bf16.mxu0 0
      %852 = vmatpush1.bf16.msra.mxu0 0
      %853 = vmatprep.subr.bf16.mxu0 0
      %854 = vmatpush1.bf16.msra.mxu0 0
      %855 = vmatprep.subr.bf16.mxu0 0
      %856 = vmatpush1.bf16.msra.mxu0 0
      %857 = vmatprep.subr.bf16.mxu0 0
      %858 = vmatpush1.bf16.msra.mxu0 0
      %859 = vmatprep.subr.bf16.mxu0 0
      %860 = vmatpush1.bf16.msra.mxu0 0
      %861 = vmatprep.mubr.bf16.mxu0 0
      %862 = vmatmul.mubr.bf16.gmra.mrb[0].mxu0 %v713
      %v863 = vpop.f32.mrb[0].mxu0
      %v864 = vadd.f32 %v744, %v863
      %v865 = vpop.f32.mrb[0].mxu0
      %v866 = vadd.f32 %v748, %v865
      %v867 = vpop.f32.mrb[0].mxu0
      %v868 = vadd.f32 %v744, %v867
      %v869 = vpop.f32.mrb[0].mxu0
      %v870 = vadd.f32 %v748, %v869
      %871 = vdwg.mxu0
      %v872 = vmax.f32 %v864, 0.0
      %v873 = vmax.f32 %v866, 0.0
      %v874 = vmax.f32 %v868, 0.0
      %v875 = vmax.f32 %v870, 0.0
      %v876 = vmax.f32 %v872, %v873
      %v877 = vmax.f32 %v874, %v875
      %v878 = vpack.c.bf16 %v877, %v876
      %v880 = vunpack.c.l.b16 %v878
      %v881 = vunpack.c.h.b16 %v878
      %v882 = vpack.c.b16 %v880, %v880
      %v883 = vpack.c.b16 %v881, %v881
      %886 = vst [vmem:[%s229] sm:$0xf] %v882
      %887 = vst [vmem:[%s229 + $0x4] sm:$0xf] %v883
      %s888 = smul.u32 2, %s16
      %p889 = scmp.lt.s32.totalorder %s888, 3
      %s890 = scalar_select %p889, %s888, 3
      %s891 = smul.addr %s890, 4
      %s892 = scalar_lea.vmem %s5, %s891
      // Predicated region
      $region41: #{music_highlighter_forward.2} parent=39 // pred_check
        %p893 = pneg %p144
      $region42: #{music_highlighter_forward.2} parent=39 // pred_check_branch
        %895 = sbr.rel (%p893) target = $region44
      $region43: #{music_highlighter_forward.2} parent=39 // pred_region
        %s896 = smul.u32 2, %s16
      $region44: #{music_highlighter_forward.2} parent=39 // pred_fallthru
        _
    $region40: #{music_highlighter_forward.2} parent=5 // pred_fallthru
      _
    %p897 = scmp.le.s32.totalorder 2, %s11
    // Predicated region
    $region45: #{music_highlighter_forward.2} parent=5 // pred_check
      %p898 = pneg %p897
    $region46: #{music_highlighter_forward.2} parent=5 // pred_check_branch
      %900 = sbr.rel (%p898) target = $region48
    $region47: #{music_highlighter_forward.2} parent=5 // pred_region
      %s901 = ssub.s32 %s11, 2
      // Predicated region
      $region49: #{music_highlighter_forward.2} parent=47 // pred_check
        %p902 = pneg %p150
      $region50: #{music_highlighter_forward.2} parent=47 // pred_check_branch
        %904 = sbr.rel (%p902) target = $region52
      $region51: #{music_highlighter_forward.2} parent=47 // pred_region
        %s905 = smul.u32 2, %s17
        %p906 = scmp.lt.s32.totalorder %s905, 3
        %s907 = scalar_select %p906, %s905, 3
        %s908 = smul.addr %s907, 4
        %s909 = scalar_lea.vmem %s5, %s908
      $region52: #{music_highlighter_forward.2} parent=47 // pred_fallthru
        _
    $region48: #{music_highlighter_forward.2} parent=5 // pred_fallthru
      _
  $region6: #{music_highlighter_forward.2} parent=0 // loop_footer
    %s15 = sadd.s32 1, %s11
  $region7: #{music_highlighter_forward.2} parent=0 // loop_footer_branch
    %10 = sbr.rel target = $region3
  $region8: #{music_highlighter_forward.2} parent=0 // loop_exit
    _

// kernel: music_highlighter_forward.3
$region0: #{music_highlighter_forward.3}
  #allocation0 [shape = 'u32[]', space=smem, size = 0x4, offset = 0x4, fixed_abs, tag = 'smem constant byte address 0x4 - core index']
  #allocation1 [shape = 'u32[144,128]{1,0:T(1,128)}', space=vmem, size = 0x12000, scoped, tag = 'internal scratch']
  %s0 = inlined_call_operand.vmem [shape: bf16[32,128], index: 0, kind: input, shape index: {}]
  %s1 = inlined_call_operand.vmem [shape: f32[32,128], index: 1, kind: input, shape index: {}]
  %s2 = inlined_call_operand.vmem [shape: f32[2,16,1], index: 2, kind: input, shape index: {}]
  %s3 = inlined_call_operand.vmem [shape: f32[128,256], index: 3, kind: input, shape index: {}]
  %s4 = inlined_call_operand.vmem [shape: f32[3,128], index: 4, kind: input, shape index: {}]
  %s5 = inlined_call_operand.vmem [shape: f32[128,128], index: 5, kind: input, shape index: {}]
  %s6 = inlined_call_operand.vmem [shape: f32[128,128], index: 6, kind: input, shape index: {}]
  %s7 = inlined_call_operand.vmem [shape: f32[2,128], index: 7, kind: input, shape index: {}]
  %s8 = inlined_call_operand.hbm [shape: f32[2,128], index: 8, kind: output, shape index: {0}]
  %s9 = inlined_call_operand.vmem [shape: f32[2,16,1], index: 9, kind: output, shape index: {1}]
  %10 = xla_tuple %s8, %s9
  %s11 = sld [smem:[#allocation0]]
  $region50: #{music_highlighter_forward.3} parent=0
    _
  %s13 = ssub.s32 1, %s11
  %s14 = scalar_select 0, %s13, %s11
  $region1: #{music_highlighter_forward.3} parent=0
    #allocation2 [shape = 'u8[1024]{0}', space=vmem, size = 0x400, scoped, tag = 'output window, operand 0, single buffered']
    #allocation3 [shape = 's32[1]{0}', space=sflag, size = 0x4, scoped, tag = 'scoped memory for music_highlighter_forward.3']
    %15 = vsyncpa [#allocation3], 0
    // Predicated region
    $region2: #{music_highlighter_forward.3} parent=1 // pred_check
      _
    $region3: #{music_highlighter_forward.3} parent=1 // pred_check_branch
      %17 = sbr.rel (0) target = $region5
    $region4: #{music_highlighter_forward.3} parent=1 // pred_region
      _
    $region5: #{music_highlighter_forward.3} parent=1 // pred_fallthru
      _
    // Predicated region
    $region6: #{music_highlighter_forward.3} parent=1 // pred_check
      _
    $region7: #{music_highlighter_forward.3} parent=1 // pred_check_branch
      %19 = sbr.rel (0) target = $region9
    $region8: #{music_highlighter_forward.3} parent=1 // pred_region
      _
    $region9: #{music_highlighter_forward.3} parent=1 // pred_fallthru
      _
    // Predicated region
    $region10: #{music_highlighter_forward.3} parent=1 // pred_check
      _
    $region11: #{music_highlighter_forward.3} parent=1 // pred_check_branch
      %21 = sbr.rel (0) target = $region13
    $region12: #{music_highlighter_forward.3} parent=1 // pred_region
      _
    $region13: #{music_highlighter_forward.3} parent=1 // pred_fallthru
      _
    // Predicated region
    $region14: #{music_highlighter_forward.3} parent=1 // pred_check
      _
    $region15: #{music_highlighter_forward.3} parent=1 // pred_check_branch
      %23 = sbr.rel (0) target = $region17
    $region16: #{music_highlighter_forward.3} parent=1 // pred_region
      _
    $region17: #{music_highlighter_forward.3} parent=1 // pred_fallthru
      _
    // Predicated region
    $region18: #{music_highlighter_forward.3} parent=1 // pred_check
      _
    $region19: #{music_highlighter_forward.3} parent=1 // pred_check_branch
      %25 = sbr.rel (0) target = $region21
    $region20: #{music_highlighter_forward.3} parent=1 // pred_region
      _
    $region21: #{music_highlighter_forward.3} parent=1 // pred_fallthru
      _
    // Predicated region
    $region22: #{music_highlighter_forward.3} parent=1 // pred_check
      _
    $region23: #{music_highlighter_forward.3} parent=1 // pred_check_branch
      %27 = sbr.rel (0) target = $region25
    $region24: #{music_highlighter_forward.3} parent=1 // pred_region
      _
    $region25: #{music_highlighter_forward.3} parent=1 // pred_fallthru
      _
    // Predicated region
    $region26: #{music_highlighter_forward.3} parent=1 // pred_check
      _
    $region27: #{music_highlighter_forward.3} parent=1 // pred_check_branch
      %29 = sbr.rel (0) target = $region29
    $region28: #{music_highlighter_forward.3} parent=1 // pred_region
      _
    $region29: #{music_highlighter_forward.3} parent=1 // pred_fallthru
      _
    // Predicated region
    $region30: #{music_highlighter_forward.3} parent=1 // pred_check
      _
    $region31: #{music_highlighter_forward.3} parent=1 // pred_check_branch
      %31 = sbr.rel (0) target = $region33
    $region32: #{music_highlighter_forward.3} parent=1 // pred_region
      _
    $region33: #{music_highlighter_forward.3} parent=1 // pred_fallthru
      _
    %v32 = vld [vmem:[%s0] sm:$0xf]
    %v33 = vld [vmem:[%s0 + $0x4] sm:$0xf]
    %v34 = vld [vmem:[%s0 + $0x8] sm:$0xf]
    %v35 = vld [vmem:[%s0 + $0xc] sm:$0xf]
    %v36 = vunpack.c.l.bf16 %v32
    %v37 = vunpack.c.l.bf16 %v33
    %v38 = vunpack.c.l.bf16 %v34
    %v39 = vunpack.c.l.bf16 %v35
    %v40 = vld [vmem:[%s1] sm:$0xff]
    %v41 = vld [vmem:[%s1 + $0x8] sm:$0xff]
    %v42 = vld [vmem:[%s1 + $0x10] sm:$0xff]
    %v43 = vld [vmem:[%s1 + $0x18] sm:$0xff]
    %v44 = vadd.f32 %v36, %v40
    %v45 = vadd.f32 %v37, %v41
    %v46 = vadd.f32 %v38, %v42
    %v47 = vadd.f32 %v39, %v43
    %v48 = vld [vmem:[%s3] sm:$0xff]
    %v49 = vld [vmem:[%s3 + $0x8] sm:$0xff]
    %v50 = vld [vmem:[%s3 + $0x10] sm:$0xff]
    %v51 = vld [vmem:[%s3 + $0x18] sm:$0xff]
    %v52 = vld [vmem:[%s3 + $0x20] sm:$0xff]
    %v53 = vld [vmem:[%s3 + $0x28] sm:$0xff]
    %v54 = vld [vmem:[%s3 + $0x30] sm:$0xff]
    %v55 = vld [vmem:[%s3 + $0x38] sm:$0xff]
    %v56 = vld [vmem:[%s3 + $0x40] sm:$0xff]
    %v57 = vld [vmem:[%s3 + $0x48] sm:$0xff]
    %v58 = vld [vmem:[%s3 + $0x50] sm:$0xff]
    %v59 = vld [vmem:[%s3 + $0x58] sm:$0xff]
    %v60 = vld [vmem:[%s3 + $0x60] sm:$0xff]
    %v61 = vld [vmem:[%s3 + $0x68] sm:$0xff]
    %v62 = vld [vmem:[%s3 + $0x70] sm:$0xff]
    %v63 = vld [vmem:[%s3 + $0x78] sm:$0xff]
    %v64 = vld [vmem:[%s3 + $0x80] sm:$0xff]
    %v65 = vld [vmem:[%s3 + $0x88] sm:$0xff]
    %v66 = vld [vmem:[%s3 + $0x90] sm:$0xff]
    %v67 = vld [vmem:[%s3 + $0x98] sm:$0xff]
    %v68 = vld [vmem:[%s3 + $0xa0] sm:$0xff]
    %v69 = vld [vmem:[%s3 + $0xa8] sm:$0xff]
    %v70 = vld [vmem:[%s3 + $0xb0] sm:$0xff]
    %v71 = vld [vmem:[%s3 + $0xb8] sm:$0xff]
    %v72 = vld [vmem:[%s3 + $0xc0] sm:$0xff]
    %v73 = vld [vmem:[%s3 + $0xc8] sm:$0xff]
    %v74 = vld [vmem:[%s3 + $0xd0] sm:$0xff]
    %v75 = vld [vmem:[%s3 + $0xd8] sm:$0xff]
    %v76 = vld [vmem:[%s3 + $0xe0] sm:$0xff]
    %v77 = vld [vmem:[%s3 + $0xe8] sm:$0xff]
    %v78 = vld [vmem:[%s3 + $0xf0] sm:$0xff]
    %v79 = vld [vmem:[%s3 + $0xf8] sm:$0xff]
    %v80 = vld [vmem:[%s4] sm:$0x7]
    %v81 = vlaneseq
    %v82 = vshrl.u32 %v81, 7
    %v83 = vsub.s32 0, %v82
    %v84 = vrot.slane %v80, %v83
    %85 = vmatprep.subr.mxu0 0.0
    %86 = vmatpush1.msra.mxu0 %v48
    %87 = vmatprep.subr.mxu0 0.0
    %88 = vmatpush1.msra.mxu0 %v50
    %89 = vmatprep.subr.mxu0 0.0
    %90 = vmatpush1.msra.mxu0 %v52
    %91 = vmatprep.subr.mxu0 0.0
    %92 = vmatpush1.msra.mxu0 %v54
    %93 = vmatprep.subr.mxu0 0.0
    %94 = vmatpush1.msra.mxu0 %v56
    %95 = vmatprep.subr.mxu0 0.0
    %96 = vmatpush1.msra.mxu0 %v58
    %97 = vmatprep.subr.mxu0 0.0
    %98 = vmatpush1.msra.mxu0 %v60
    %99 = vmatprep.subr.mxu0 0.0
    %100 = vmatpush1.msra.mxu0 %v62
    %101 = vmatprep.subr.mxu0 0.0
    %102 = vmatpush1.msra.mxu0 %v64
    %103 = vmatprep.subr.mxu0 0.0
    %104 = vmatpush1.msra.mxu0 %v66
    %105 = vmatprep.subr.mxu0 0.0
    %106 = vmatpush1.msra.mxu0 %v68
    %107 = vmatprep.subr.mxu0 0.0
    %108 = vmatpush1.msra.mxu0 %v70
    %109 = vmatprep.subr.mxu0 0.0
    %110 = vmatpush1.msra.mxu0 %v72
    %111 = vmatprep.subr.mxu0 0.0
    %112 = vmatpush1.msra.mxu0 %v74
    %113 = vmatprep.subr.mxu0 0.0
    %114 = vmatpush1.msra.mxu0 %v76
    %115 = vmatprep.subr.mxu0 0.0
    %116 = vmatpush1.msra.mxu0 %v78
    %117 = vmatprep.subr.mxu0 0.0
    %118 = vmatpush1.msra.mxu0 0.0
    %119 = vmatprep.subr.mxu0 0.0
    %120 = vmatpush1.msra.mxu0 0.0
    %121 = vmatprep.subr.mxu0 0.0
    %122 = vmatpush1.msra.mxu0 0.0
    %123 = vmatprep.subr.mxu0 0.0
    %124 = vmatpush1.msra.mxu0 0.0
    %125 = vmatprep.subr.mxu0 0.0
    %126 = vmatpush1.msra.mxu0 0.0
    %127 = vmatprep.subr.mxu0 0.0
    %128 = vmatpush1.msra.mxu0 0.0
    %129 = vmatprep.subr.mxu0 0.0
    %130 = vmatpush1.msra.mxu0 0.0
    %131 = vmatprep.subr.mxu0 0.0
    %132 = vmatpush1.msra.mxu0 0.0
    %133 = vmatprep.subr.mxu0 0.0
    %134 = vmatpush1.msra.mxu0 0.0
    %135 = vmatprep.subr.mxu0 0.0
    %136 = vmatpush1.msra.mxu0 0.0
    %137 = vmatprep.subr.mxu0 0.0
    %138 = vmatpush1.msra.mxu0 0.0
    %139 = vmatprep.subr.mxu0 0.0
    %140 = vmatpush1.msra.mxu0 0.0
    %141 = vmatprep.subr.mxu0 0.0
    %142 = vmatpush1.msra.mxu0 0.0
    %143 = vmatprep.subr.mxu0 0.0
    %144 = vmatpush1.msra.mxu0 0.0
    %145 = vmatprep.subr.mxu0 0.0
    %146 = vmatpush1.msra.mxu0 0.0
    %147 = vmatprep.subr.mxu0 0.0
    %148 = vmatpush1.msra.mxu0 0.0
    %149 = vmatprep.mubr.f32.mxu0 0.0
    %150 = vmatmul.mubr.f32.gmra.mrb[0].mxu0 %v44
    %v151 = vpop.f32.mrb[0].mxu0
    %v152 = vadd.f32 %v84, %v151
    %v153 = vpop.f32.mrb[0].mxu0
    %154 = vmatprep.mubr.f32.mxu0 0.0
    %155 = vmatmul.mubr.f32.gmra.mrb[0].mxu0 %v45
    %v156 = vpop.f32.mrb[0].mxu0
    %v157 = vadd.f32 %v84, %v156
    %v158 = vpop.f32.mrb[0].mxu0
    %159 = vmatprep.mubr.f32.mxu0 0.0
    %160 = vmatmul.mubr.f32.gmra.mrb[0].mxu0 %v46
    %v161 = vpop.f32.mrb[0].mxu0
    %v162 = vadd.f32 %v84, %v161
    %v163 = vpop.f32.mrb[0].mxu0
    %164 = vmatprep.mubr.f32.mxu0 0.0
    %165 = vmatmul.mubr.f32.gmra.mrb[0].mxu0 %v47
    %v166 = vpop.f32.mrb[0].mxu0
    %v167 = vadd.f32 %v84, %v166
    %v168 = vpop.f32.mrb[0].mxu0
    %169 = vdwg.mxu0
    %v170 = vmax.f32 %v152, 0.0
    %v171 = vmax.f32 %v157, 0.0
    %v172 = vmax.f32 %v162, 0.0
    %v173 = vmax.f32 %v167, 0.0
    %v174 = vlaneseq
    %v175 = vshrl.u32 %v174, 7
    %v176 = vsub.s32 1, %v175
    %v177 = vrot.slane %v80, %v176
    %178 = vmatprep.subr.mxu0 0.0
    %179 = vmatpush1.msra.mxu0 %v49
    %180 = vmatprep.subr.mxu0 0.0
    %181 = vmatpush1.msra.mxu0 %v51
    %182 = vmatprep.subr.mxu0 0.0
    %183 = vmatpush1.msra.mxu0 %v53
    %184 = vmatprep.subr.mxu0 0.0
    %185 = vmatpush1.msra.mxu0 %v55
    %186 = vmatprep.subr.mxu0 0.0
    %187 = vmatpush1.msra.mxu0 %v57
    %188 = vmatprep.subr.mxu0 0.0
    %189 = vmatpush1.msra.mxu0 %v59
    %190 = vmatprep.subr.mxu0 0.0
    %191 = vmatpush1.msra.mxu0 %v61
    %192 = vmatprep.subr.mxu0 0.0
    %193 = vmatpush1.msra.mxu0 %v63
    %194 = vmatprep.subr.mxu0 0.0
    %195 = vmatpush1.msra.mxu0 %v65
    %196 = vmatprep.subr.mxu0 0.0
    %197 = vmatpush1.msra.mxu0 %v67
    %198 = vmatprep.subr.mxu0 0.0
    %199 = vmatpush1.msra.mxu0 %v69
    %200 = vmatprep.subr.mxu0 0.0
    %201 = vmatpush1.msra.mxu0 %v71
    %202 = vmatprep.subr.mxu0 0.0
    %203 = vmatpush1.msra.mxu0 %v73
    %204 = vmatprep.subr.mxu0 0.0
    %205 = vmatpush1.msra.mxu0 %v75
    %206 = vmatprep.subr.mxu0 0.0
    %207 = vmatpush1.msra.mxu0 %v77
    %208 = vmatprep.subr.mxu0 0.0
    %209 = vmatpush1.msra.mxu0 %v79
    %210 = vmatprep.subr.mxu0 0.0
    %211 = vmatpush1.msra.mxu0 0.0
    %212 = vmatprep.subr.mxu0 0.0
    %213 = vmatpush1.msra.mxu0 0.0
    %214 = vmatprep.subr.mxu0 0.0
    %215 = vmatpush1.msra.mxu0 0.0
    %216 = vmatprep.subr.mxu0 0.0
    %217 = vmatpush1.msra.mxu0 0.0
    %218 = vmatprep.subr.mxu0 0.0
    %219 = vmatpush1.msra.mxu0 0.0
    %220 = vmatprep.subr.mxu0 0.0
    %221 = vmatpush1.msra.mxu0 0.0
    %222 = vmatprep.subr.mxu0 0.0
    %223 = vmatpush1.msra.mxu0 0.0
    %224 = vmatprep.subr.mxu0 0.0
    %225 = vmatpush1.msra.mxu0 0.0
    %226 = vmatprep.subr.mxu0 0.0
    %227 = vmatpush1.msra.mxu0 0.0
    %228 = vmatprep.subr.mxu0 0.0
    %229 = vmatpush1.msra.mxu0 0.0
    %230 = vmatprep.subr.mxu0 0.0
    %231 = vmatpush1.msra.mxu0 0.0
    %232 = vmatprep.subr.mxu0 0.0
    %233 = vmatpush1.msra.mxu0 0.0
    %234 = vmatprep.subr.mxu0 0.0
    %235 = vmatpush1.msra.mxu0 0.0
    %236 = vmatprep.subr.mxu0 0.0
    %237 = vmatpush1.msra.mxu0 0.0
    %238 = vmatprep.subr.mxu0 0.0
    %239 = vmatpush1.msra.mxu0 0.0
    %240 = vmatprep.subr.mxu0 0.0
    %241 = vmatpush1.msra.mxu0 0.0
    %242 = vmatprep.mubr.f32.mxu0 0.0
    %243 = vmatmul.mubr.f32.gmra.mrb[0].mxu0 %v170
    %v244 = vpop.f32.mrb[0].mxu0
    %v245 = vadd.f32 %v177, %v244
    %v246 = vpop.f32.mrb[0].mxu0
    %247 = vmatprep.mubr.f32.mxu0 0.0
    %248 = vmatmul.mubr.f32.gmra.mrb[0].mxu0 %v171
    %v249 = vpop.f32.mrb[0].mxu0
    %v250 = vadd.f32 %v177, %v249
    %v251 = vpop.f32.mrb[0].mxu0
    %252 = vmatprep.mubr.f32.mxu0 0.0
    %253 = vmatmul.mubr.f32.gmra.mrb[0].mxu0 %v172
    %v254 = vpop.f32.mrb[0].mxu0
    %v255 = vadd.f32 %v177, %v254
    %v256 = vpop.f32.mrb[0].mxu0
    %257 = vmatprep.mubr.f32.mxu0 0.0
    %258 = vmatmul.mubr.f32.gmra.mrb[0].mxu0 %v173
    %v259 = vpop.f32.mrb[0].mxu0
    %v260 = vadd.f32 %v177, %v259
    %v261 = vpop.f32.mrb[0].mxu0
    %262 = vdwg.mxu0
    %v263 = vtanh.pop %v245
    %v264 = vtanh.pop %v250
    %v265 = vtanh.pop %v255
    %v266 = vtanh.pop %v260
    %v267 = vlaneseq
    %v268 = vshrl.u32 %v267, 7
    %v269 = vsub.s32 2, %v268
    %v270 = vrot.slane %v80, %v269
    %v271 = vmul.f32 %v263, %v270
    %v272 = vmul.f32 %v264, %v270
    %v273 = vmul.f32 %v265, %v270
    %v274 = vmul.f32 %v266, %v270
    %275 = vadd.xlane.f32.xlu0 %v271
    %v276 = vpop.xlane.xlu0 %275
    %277 = vadd.xlane.f32.xlu0 %v272
    %v278 = vpop.xlane.xlu0 %277
    %279 = vadd.xlane.f32.xlu0 %v273
    %v280 = vpop.xlane.xlu0 %279
    %281 = vadd.xlane.f32.xlu0 %v274
    %v282 = vpop.xlane.xlu0 %281
    %v283 = vld [vmem:[%s2] sm:$0xff]
    %v284 = vld [vmem:[%s2 + $0x8] sm:$0xff]
    %v285 = vld [vmem:[%s2 + $0x10] sm:$0xff]
    %v286 = vld [vmem:[%s2 + $0x18] sm:$0xff]
    %v287 = vsub.f32 1.0, %v283
    %v288 = vsub.f32 1.0, %v284
    %v289 = vsub.f32 1.0, %v285
    %v290 = vsub.f32 1.0, %v286
    %v291 = vmul.f32 %v287, -1e+30
    %v292 = vmul.f32 %v288, -1e+30
    %v293 = vmul.f32 %v289, -1e+30
    %v294 = vmul.f32 %v290, -1e+30
    %v295 = vadd.f32 %v276, %v291
    %v296 = vadd.f32 %v278, %v292
    %v297 = vadd.f32 %v280, %v293
    %v298 = vadd.f32 %v282, %v294
    %vm299 = vcmask 7168
    %v300 = vsel %vm299, %v295, -inf
    %v301 = vsel %vm299, %v296, -inf
    %v302 = vmax.f32 %v300, %v301
    %v303 = vrot.slane %v302, 4
    %v304 = vmax.f32 %v302, %v303
    %v305 = vrot.slane %v304, 2
    %v306 = vmax.f32 %v304, %v305
    %v307 = vrot.slane %v306, 1
    %v308 = vmax.f32 %v306, %v307
    %v309 = vsel %vm299, %v297, -inf
    %v310 = vsel %vm299, %v298, -inf
    %v311 = vmax.f32 %v309, %v310
    %v312 = vrot.slane %v311, 4
    %v313 = vmax.f32 %v311, %v312
    %v314 = vrot.slane %v313, 2
    %v315 = vmax.f32 %v313, %v314
    %v316 = vrot.slane %v315, 1
    %v317 = vmax.f32 %v315, %v316
    %v318 = vsub.f32 %v295, %v308
    %v319 = vsub.f32 %v296, %v308
    %v320 = vsub.f32 %v297, %v317
    %v321 = vsub.f32 %v298, %v317
    %v322 = vmul.f32 %v318, 1.442695
    %v323 = vpow.pop %v322
    %v324 = vmul.f32 %v319, 1.442695
    %v325 = vpow.pop %v324
    %v326 = vmul.f32 %v320, 1.442695
    %v327 = vpow.pop %v326
    %v328 = vmul.f32 %v321, 1.442695
    %v329 = vpow.pop %v328
    %v330 = vmul.f32 %v323, %v283
    %v331 = vmul.f32 %v325, %v284
    %v332 = vmul.f32 %v327, %v285
    %v333 = vmul.f32 %v329, %v286
    %v334 = vsel %vm299, %v330, 0.0
    %v335 = vsel %vm299, %v331, 0.0
    %v336 = vadd.f32 %v334, %v335
    %v337 = vrot.slane %v336, 4
    %v338 = vadd.f32 %v336, %v337
    %v339 = vrot.slane %v338, 2
    %v340 = vadd.f32 %v338, %v339
    %v341 = vrot.slane %v340, 1
    %v342 = vadd.f32 %v340, %v341
    %v343 = vsel %vm299, %v332, 0.0
    %v344 = vsel %vm299, %v333, 0.0
    %v345 = vadd.f32 %v343, %v344
    %v346 = vrot.slane %v345, 4
    %v347 = vadd.f32 %v345, %v346
    %v348 = vrot.slane %v347, 2
    %v349 = vadd.f32 %v347, %v348
    %v350 = vrot.slane %v349, 1
    %v351 = vadd.f32 %v349, %v350
    %v352 = vrcp.pop %v342
    %v353 = vmul.f32 %v330, %v352
    %v354 = vmul.f32 %v331, %v352
    %v355 = vrcp.pop %v351
    %v356 = vmul.f32 %v332, %v355
    %v357 = vmul.f32 %v333, %v355
    %358 = vst.msk [vmem:[%s9] sm:$0xff] %vm299, %v353
    %359 = vst.msk [vmem:[%s9 + $0x8] sm:$0xff] %vm299, %v354
    %360 = vst.msk [vmem:[%s9 + $0x10] sm:$0xff] %vm299, %v356
    %361 = vst.msk [vmem:[%s9 + $0x18] sm:$0xff] %vm299, %v357
    %363 = vset.pattern.permute.xlu0 0
    %364 = vperm.xlu0 %363, %v353
    %v365 = vpop.permute.xlu0 %364
    %368 = vset.pattern.permute.xlu0 0
    %369 = vperm.xlu0 %368, %v354
    %v370 = vpop.permute.xlu0 %369
    %373 = vset.pattern.permute.xlu0 0
    %374 = vperm.xlu0 %373, %v356
    %v375 = vpop.permute.xlu0 %374
    %378 = vset.pattern.permute.xlu0 0
    %379 = vperm.xlu0 %378, %v357
    %v380 = vpop.permute.xlu0 %379
    %v382 = vmul.f32 %v365, %v36
    %v383 = vmul.f32 %v370, %v37
    %v384 = vmul.f32 %v375, %v38
    %v385 = vmul.f32 %v380, %v39
    %v386 = vadd.f32 %v382, %v383
    %v387 = vrot.slane %v386, 4
    %v388 = vadd.f32 %v386, %v387
    %v389 = vrot.slane %v388, 2
    %v390 = vadd.f32 %v388, %v389
    %v391 = vrot.slane %v390, 1
    %v392 = vadd.f32 %v390, %v391
    %v393 = vadd.f32 %v384, %v385
    %v394 = vrot.slane %v393, 4
    %v395 = vadd.f32 %v393, %v394
    %v396 = vrot.slane %v395, 2
    %v397 = vadd.f32 %v395, %v396
    %v398 = vrot.slane %v397, 1
    %v399 = vadd.f32 %v397, %v398
    %v400 = vld [vmem:[%s7] sm:$0x3]
    %v401 = vld [vmem:[%s5] sm:$0xff]
    %v402 = vld [vmem:[%s5 + $0x8] sm:$0xff]
    %v403 = vld [vmem:[%s5 + $0x10] sm:$0xff]
    %v404 = vld [vmem:[%s5 + $0x18] sm:$0xff]
    %v405 = vld [vmem:[%s5 + $0x20] sm:$0xff]
    %v406 = vld [vmem:[%s5 + $0x28] sm:$0xff]
    %v407 = vld [vmem:[%s5 + $0x30] sm:$0xff]
    %v408 = vld [vmem:[%s5 + $0x38] sm:$0xff]
    %v409 = vld [vmem:[%s5 + $0x40] sm:$0xff]
    %v410 = vld [vmem:[%s5 + $0x48] sm:$0xff]
    %v411 = vld [vmem:[%s5 + $0x50] sm:$0xff]
    %v412 = vld [vmem:[%s5 + $0x58] sm:$0xff]
    %v413 = vld [vmem:[%s5 + $0x60] sm:$0xff]
    %v414 = vld [vmem:[%s5 + $0x68] sm:$0xff]
    %v415 = vld [vmem:[%s5 + $0x70] sm:$0xff]
    %v416 = vld [vmem:[%s5 + $0x78] sm:$0xff]
    %v417 = vlaneseq
    %v418 = vshrl.u32 %v417, 7
    %v419 = vsub.s32 0, %v418
    %v420 = vrot.slane %v400, %v419
    %vm423 = vcmask 1041409
    %v424 = vsel %vm423, %v399, %v392
    %426 = vmatprep.subr.mxu0 0.0
    %427 = vmatpush1.msra.mxu0 %v401
    %428 = vmatprep.subr.mxu0 0.0
    %429 = vmatpush1.msra.mxu0 %v402
    %430 = vmatprep.subr.mxu0 0.0
    %431 = vmatpush1.msra.mxu0 %v403
    %432 = vmatprep.subr.mxu0 0.0
    %433 = vmatpush1.msra.mxu0 %v404
    %434 = vmatprep.subr.mxu0 0.0
    %435 = vmatpush1.msra.mxu0 %v405
    %436 = vmatprep.subr.mxu0 0.0
    %437 = vmatpush1.msra.mxu0 %v406
    %438 = vmatprep.subr.mxu0 0.0
    %439 = vmatpush1.msra.mxu0 %v407
    %440 = vmatprep.subr.mxu0 0.0
    %441 = vmatpush1.msra.mxu0 %v408
    %442 = vmatprep.subr.mxu0 0.0
    %443 = vmatpush1.msra.mxu0 %v409
    %444 = vmatprep.subr.mxu0 0.0
    %445 = vmatpush1.msra.mxu0 %v410
    %446 = vmatprep.subr.mxu0 0.0
    %447 = vmatpush1.msra.mxu0 %v411
    %448 = vmatprep.subr.mxu0 0.0
    %449 = vmatpush1.msra.mxu0 %v412
    %450 = vmatprep.subr.mxu0 0.0
    %451 = vmatpush1.msra.mxu0 %v413
    %452 = vmatprep.subr.mxu0 0.0
    %453 = vmatpush1.msra.mxu0 %v414
    %454 = vmatprep.subr.mxu0 0.0
    %455 = vmatpush1.msra.mxu0 %v415
    %456 = vmatprep.subr.mxu0 0.0
    %457 = vmatpush1.msra.mxu0 %v416
    %458 = vmatprep.subr.mxu0 0.0
    %459 = vmatpush1.msra.mxu0 0.0
    %460 = vmatprep.subr.mxu0 0.0
    %461 = vmatpush1.msra.mxu0 0.0
    %462 = vmatprep.subr.mxu0 0.0
    %463 = vmatpush1.msra.mxu0 0.0
    %464 = vmatprep.subr.mxu0 0.0
    %465 = vmatpush1.msra.mxu0 0.0
    %466 = vmatprep.subr.mxu0 0.0
    %467 = vmatpush1.msra.mxu0 0.0
    %468 = vmatprep.subr.mxu0 0.0
    %469 = vmatpush1.msra.mxu0 0.0
    %470 = vmatprep.subr.mxu0 0.0
    %471 = vmatpush1.msra.mxu0 0.0
    %472 = vmatprep.subr.mxu0 0.0
    %473 = vmatpush1.msra.mxu0 0.0
    %474 = vmatprep.subr.mxu0 0.0
    %475 = vmatpush1.msra.mxu0 0.0
    %476 = vmatprep.subr.mxu0 0.0
    %477 = vmatpush1.msra.mxu0 0.0
    %478 = vmatprep.subr.mxu0 0.0
    %479 = vmatpush1.msra.mxu0 0.0
    %480 = vmatprep.subr.mxu0 0.0
    %481 = vmatpush1.msra.mxu0 0.0
    %482 = vmatprep.subr.mxu0 0.0
    %483 = vmatpush1.msra.mxu0 0.0
    %484 = vmatprep.subr.mxu0 0.0
    %485 = vmatpush1.msra.mxu0 0.0
    %486 = vmatprep.subr.mxu0 0.0
    %487 = vmatpush1.msra.mxu0 0.0
    %488 = vmatprep.subr.mxu0 0.0
    %489 = vmatpush1.msra.mxu0 0.0
    %490 = vmatprep.mubr.f32.mxu0 0.0
    %491 = vmatmul.mubr.f32.gmra.mrb[0].mxu0 %v424
    %v492 = vpop.f32.mrb[0].mxu0
    %v493 = vadd.f32 %v420, %v492
    %v494 = vpop.f32.mrb[0].mxu0
    %495 = vdwg.mxu0
    %v496 = vmax.f32 %v493, 0.0
    %v497 = vld [vmem:[%s6] sm:$0xff]
    %v498 = vld [vmem:[%s6 + $0x8] sm:$0xff]
    %v499 = vld [vmem:[%s6 + $0x10] sm:$0xff]
    %v500 = vld [vmem:[%s6 + $0x18] sm:$0xff]
    %v501 = vld [vmem:[%s6 + $0x20] sm:$0xff]
    %v502 = vld [vmem:[%s6 + $0x28] sm:$0xff]
    %v503 = vld [vmem:[%s6 + $0x30] sm:$0xff]
    %v504 = vld [vmem:[%s6 + $0x38] sm:$0xff]
    %v505 = vld [vmem:[%s6 + $0x40] sm:$0xff]
    %v506 = vld [vmem:[%s6 + $0x48] sm:$0xff]
    %v507 = vld [vmem:[%s6 + $0x50] sm:$0xff]
    %v508 = vld [vmem:[%s6 + $0x58] sm:$0xff]
    %v509 = vld [vmem:[%s6 + $0x60] sm:$0xff]
    %v510 = vld [vmem:[%s6 + $0x68] sm:$0xff]
    %v511 = vld [vmem:[%s6 + $0x70] sm:$0xff]
    %v512 = vld [vmem:[%s6 + $0x78] sm:$0xff]
    %v513 = vlaneseq
    %v514 = vshrl.u32 %v513, 7
    %v515 = vsub.s32 1, %v514
    %v516 = vrot.slane %v400, %v515
    %517 = vmatprep.subr.mxu0 0.0
    %518 = vmatpush1.msra.mxu0 %v497
    %519 = vmatprep.subr.mxu0 0.0
    %520 = vmatpush1.msra.mxu0 %v498
    %521 = vmatprep.subr.mxu0 0.0
    %522 = vmatpush1.msra.mxu0 %v499
    %523 = vmatprep.subr.mxu0 0.0
    %524 = vmatpush1.msra.mxu0 %v500
    %525 = vmatprep.subr.mxu0 0.0
    %526 = vmatpush1.msra.mxu0 %v501
    %527 = vmatprep.subr.mxu0 0.0
    %528 = vmatpush1.msra.mxu0 %v502
    %529 = vmatprep.subr.mxu0 0.0
    %530 = vmatpush1.msra.mxu0 %v503
    %531 = vmatprep.subr.mxu0 0.0
    %532 = vmatpush1.msra.mxu0 %v504
    %533 = vmatprep.subr.mxu0 0.0
    %534 = vmatpush1.msra.mxu0 %v505
    %535 = vmatprep.subr.mxu0 0.0
    %536 = vmatpush1.msra.mxu0 %v506
    %537 = vmatprep.subr.mxu0 0.0
    %538 = vmatpush1.msra.mxu0 %v507
    %539 = vmatprep.subr.mxu0 0.0
    %540 = vmatpush1.msra.mxu0 %v508
    %541 = vmatprep.subr.mxu0 0.0
    %542 = vmatpush1.msra.mxu0 %v509
    %543 = vmatprep.subr.mxu0 0.0
    %544 = vmatpush1.msra.mxu0 %v510
    %545 = vmatprep.subr.mxu0 0.0
    %546 = vmatpush1.msra.mxu0 %v511
    %547 = vmatprep.subr.mxu0 0.0
    %548 = vmatpush1.msra.mxu0 %v512
    %549 = vmatprep.subr.mxu0 0.0
    %550 = vmatpush1.msra.mxu0 0.0
    %551 = vmatprep.subr.mxu0 0.0
    %552 = vmatpush1.msra.mxu0 0.0
    %553 = vmatprep.subr.mxu0 0.0
    %554 = vmatpush1.msra.mxu0 0.0
    %555 = vmatprep.subr.mxu0 0.0
    %556 = vmatpush1.msra.mxu0 0.0
    %557 = vmatprep.subr.mxu0 0.0
    %558 = vmatpush1.msra.mxu0 0.0
    %559 = vmatprep.subr.mxu0 0.0
    %560 = vmatpush1.msra.mxu0 0.0
    %561 = vmatprep.subr.mxu0 0.0
    %562 = vmatpush1.msra.mxu0 0.0
    %563 = vmatprep.subr.mxu0 0.0
    %564 = vmatpush1.msra.mxu0 0.0
    %565 = vmatprep.subr.mxu0 0.0
    %566 = vmatpush1.msra.mxu0 0.0
    %567 = vmatprep.subr.mxu0 0.0
    %568 = vmatpush1.msra.mxu0 0.0
    %569 = vmatprep.subr.mxu0 0.0
    %570 = vmatpush1.msra.mxu0 0.0
    %571 = vmatprep.subr.mxu0 0.0
    %572 = vmatpush1.msra.mxu0 0.0
    %573 = vmatprep.subr.mxu0 0.0
    %574 = vmatpush1.msra.mxu0 0.0
    %575 = vmatprep.subr.mxu0 0.0
    %576 = vmatpush1.msra.mxu0 0.0
    %577 = vmatprep.subr.mxu0 0.0
    %578 = vmatpush1.msra.mxu0 0.0
    %579 = vmatprep.subr.mxu0 0.0
    %580 = vmatpush1.msra.mxu0 0.0
    %581 = vmatprep.mubr.f32.mxu0 0.0
    %582 = vmatmul.mubr.f32.gmra.mrb[0].mxu0 %v496
    %v583 = vpop.f32.mrb[0].mxu0
    %v584 = vadd.f32 %v516, %v583
    %v585 = vpop.f32.mrb[0].mxu0
    %586 = vdwg.mxu0
    %v587 = vxor.u32 %v584, 2147483648
    %v588 = vmul.f32 %v587, 1.442695
    %v589 = vpow.pop %v588
    %v590 = vadd.f32 %v589, 1.0
    %v591 = vrcp.pop %v590
    %v592 = vmul.f32 1.0, %v591
    %593 = vst [vmem:[#allocation2] sm:$0x3] %v592
    // Predicated region
    $region34: #{music_highlighter_forward.3} parent=1 // pred_check
      _
    $region35: #{music_highlighter_forward.3} parent=1 // pred_check_branch
      %595 = sbr.rel (0) target = $region37
    $region36: #{music_highlighter_forward.3} parent=1 // pred_region
      %s597 = ssub.s32 32, 32
      %598 = vsyncadd [#allocation3], %s597
      %s600 = sshll.u32 [#allocation2], 4
      %s601 = int_to_ptr.vmem [resolvable:$true] %s600
      %603 = dma.vmem_to_hbm [thread:$0]  %s601, 32, %s8, [#allocation3]
    $region37: #{music_highlighter_forward.3} parent=1 // pred_fallthru
      _
    // Predicated region
    $region38: #{music_highlighter_forward.3} parent=1 // pred_check
      _
    $region39: #{music_highlighter_forward.3} parent=1 // pred_check_branch
      %605 = sbr.rel (0) target = $region41
    $region40: #{music_highlighter_forward.3} parent=1 // pred_region
      _
    $region41: #{music_highlighter_forward.3} parent=1 // pred_fallthru
      _
    // Predicated region
    $region42: #{music_highlighter_forward.3} parent=1 // pred_check
      _
    $region43: #{music_highlighter_forward.3} parent=1 // pred_check_branch
      %607 = sbr.rel (0) target = $region45
    $region44: #{music_highlighter_forward.3} parent=1 // pred_region
      %608 = dma.done [#allocation3], 32
    $region45: #{music_highlighter_forward.3} parent=1 // pred_fallthru
      _
    // Predicated region
    $region46: #{music_highlighter_forward.3} parent=1 // pred_check
      _
    $region47: #{music_highlighter_forward.3} parent=1 // pred_check_branch
      %610 = sbr.rel (0) target = $region49
    $region48: #{music_highlighter_forward.3} parent=1 // pred_region
      _
    $region49: #{music_highlighter_forward.3} parent=1 // pred_fallthru
      _
    %611 = vsyncpa [#allocation3], 1

</llo_original>
